<compile_context>
chip_gen: v7x
topology: tpu7x:2x2x1
jax: 0.10.0
libtpu: 0.0.40
codegen_flags: <defaults>
</compile_context>

<pallas_src>
import math
import numpy as np
import jax
import jax.numpy as jnp
from jax import lax
from jax.experimental import pallas as pl
from jax.experimental.pallas import tpu as pltpu

# ----- small synthetic config (module defaults scaled down) -----
ATTENTION_HEADS = 4
BUCKET_SIZE = 4            # -> input spatial = 16 * bucket_size = 64
EMBED_DIM = 32             # must be divisible by 4
PRETRAIN_BUCKET_SIZE = 4   # == bucket_size so no bicubic resize path is needed
WINDOW_SIZE = 4
LN_EPS = 1e-5              # torch nn.LayerNorm default
_INV_SQRT2 = np.float32(1.0 / math.sqrt(2.0))

assert EMBED_DIM % 4 == 0


# ---------------------------- fused Pallas kernel ----------------------------
def _ln(y, g, b):
    m = jnp.mean(y, axis=-1, keepdims=True)
    v = jnp.mean((y - m) ** 2, axis=-1, keepdims=True)
    return (y - m) * lax.rsqrt(v + LN_EPS) * g + b


def _gelu_exact(y):
    # torch nn.GELU(approximate='none'); erf keeps exact parity with the reference.
    # TODO(synk): if VALU ever binds at production sizes, switch to tanh-approx
    # GELU (EUP slot) — changes numerics vs. torch approximate='none'.
    return 0.5 * y * (1.0 + lax.erf(y * _INV_SQRT2))


def _fused_embed_kernel(x_ref, w1_ref, w23_ref, pvec_ref, pos_ref, o_ref):
    """Whole batch in one step: conv1+LN+GELU -> conv2+LN+GELU -> conv3 + pos.

    x_ref rows are ordered r = p1*(4*B*P3) + p2*(B*P3) + b*P3 + p3 where
      p3 = final output pixel (h3*n3w + w3),
      p2 = 2x2 offset of the stage-2 pixel inside its stage-3 window (kh*2+kw),
      p1 = 2x2 offset of the stage-1 pixel inside its stage-2 window (kh*2+kw).
    Each row holds one 4x4x3 stage-1 patch in (kh, kw, cin) order, matching the
    (kh, kw, cin, cout)-flattened conv weights.  With this ordering every stage
    transition is a static row-block slice + lane concat + one matmul.
    """
    B, P3, D = o_ref.shape
    C4 = w1_ref.shape[1]
    BP3 = B * P3

    # Packed per-channel vectors: rows = [conv1_b, ln1_g, ln1_b, conv2_b,
    # ln2_g, ln2_b, conv3_b], each padded to width D; static slices are free.
    pvec = pvec_ref[...]                                               # (7, D)
    b1, g1, be1 = pvec[0:1, 0:C4], pvec[1:2, 0:C4], pvec[2:3, 0:C4]
    b2, g2, be2 = pvec[3:4, 0:C4], pvec[4:5, 0:C4], pvec[5:6, 0:C4]
    b3 = pvec[6:7, :]

    w23 = w23_ref[...]                                                 # (4*C4, C4+D)
    w2 = w23[:, 0:C4]
    w3 = w23[:, C4:C4 + D]

    # ---- stage 1: Conv2d(3->C4, k4 s4) + LayerNorm2D + GELU, all patches at once.
    y1 = jnp.dot(x_ref[...], w1_ref[...], preferred_element_type=jnp.float32) + b1
    y1 = _gelu_exact(_ln(y1, g1, be1))                                 # (16*B*P3, C4)

    # ---- stage 2: Conv2d(C4->C4, k2 s2): lane-concat the 4 p1 row-blocks so the
    # contraction dim is 4*C4 -> single MXU push.
    y1c = jnp.concatenate(
        [y1[p * 4 * BP3:(p + 1) * 4 * BP3, :] for p in range(4)], axis=1)
    y2 = jnp.dot(y1c, w2, preferred_element_type=jnp.float32) + b2
    y2 = _gelu_exact(_ln(y2, g2, be2))                                 # (4*B*P3, C4)

    # ---- stage 3: Conv2d(C4->D, k2 s2): same trick over the 4 p2 offsets.
    y2c = jnp.concatenate(
        [y2[p * BP3:(p + 1) * BP3, :] for p in range(4)], axis=1)
    s3 = jnp.dot(y2c, w3, preferred_element_type=jnp.float32) + b3     # (B*P3, D)

    # bias + positional embedding (nn.Dropout is identity at inference).
    pos = pos_ref[...]                                                 # (P3, D)
    for b in range(B):  # B is static and tiny; per-batch block store.
        o_ref[b] = s3[b * P3:(b + 1) * P3, :] + pos


# ------------------------------- glue -----------------------------------
def _hierarchical_patchify(x_nhwc):
    """NHWC -> (16*B*P3, 48): rows ordered [p1, p2, b, p3], cols (kh, kw, cin)."""
    B, H, W, C = x_nhwc.shape
    assert H % 16 == 0 and W % 16 == 0, "H and W must be divisible by 16"
    n3h, n3w = H // 16, W // 16
    x = x_nhwc.reshape(B, n3h, 2, 2, 4, n3w, 2, 2, 4, C)
    # [b,h3,h2,h1,hk, w3,w2,w1,wk, c] -> [h1,w1, h2,w2, b, h3,w3, hk,wk, c]
    x = jnp.transpose(x, (3, 7, 2, 6, 0, 1, 5, 4, 8, 9))
    return x.reshape(16 * B * n3h * n3w, 4 * 4 * C), (B, n3h, n3w)


def _conv_w_to_mat(w, k):
    # torch Conv2d weight (Cout, Cin, kh, kw) -> (kh*kw*Cin, Cout), matching patch order.
    return jnp.transpose(w, (2, 3, 1, 0)).reshape(k * k * w.shape[1], w.shape[0])


def pack_adaptor_params(params):
    """One-time weight re-layout/packing (outside the per-call hot path)."""
    D = params["conv3_w"].shape[0]
    w1 = _conv_w_to_mat(params["conv1_w"], 4)            # (48, C4)
    w2 = _conv_w_to_mat(params["conv2_w"], 2)            # (4*C4, C4)
    w3 = _conv_w_to_mat(params["conv3_w"], 2)            # (4*C4, D)
    w23 = jnp.concatenate([w2, w3], axis=1)              # (4*C4, C4+D)

    def padrow(v):
        return jnp.pad(v, (0, D - v.shape[0]))[None, :]

    pvec = jnp.concatenate([
        padrow(params["conv1_b"]), padrow(params["ln1_g"]), padrow(params["ln1_b"]),
        padrow(params["conv2_b"]), padrow(params["ln2_g"]), padrow(params["ln2_b"]),
        params["conv3_b"][None, :]], axis=0)              # (7, D)

    pos = params["pos_embed"][1:]                         # (bucket^2, D), row-major (h, w)
    return {"w1": w1, "w23": w23, "pvec": pvec, "pos": pos}


def make_image_bucket_position(bucket_size, num_relative_distance):
    coords = np.stack(np.meshgrid(np.arange(bucket_size), np.arange(bucket_size), indexing="ij"))
    coords_flat = coords.reshape(2, -1)
    rel = coords_flat[:, :, None] - coords_flat[:, None, :]
    rel = rel.transpose(1, 2, 0).copy()
    rel[:, :, 0] += bucket_size - 1
    rel[:, :, 1] += bucket_size - 1
    rel[:, :, 0] *= 2 * bucket_size - 1
    n = bucket_size * bucket_size + 1
    idx = np.zeros((n, n), dtype=np.int64)
    idx[1:, 1:] = rel.sum(-1)
    idx[0, 0:] = num_relative_distance - 3
    idx[0:, 0] = num_relative_distance - 2
    idx[0, 0] = num_relative_distance - 1
    return idx


def _get_rel_pos_bias(params, window=False):
    src_size = 2 * PRETRAIN_BUCKET_SIZE - 1
    bs = WINDOW_SIZE if window else BUCKET_SIZE
    dst_size = 2 * bs - 1
    num_rel_dis = dst_size * dst_size + 3
    rp_bucket = jnp.asarray(make_image_bucket_position(bs, num_rel_dis)[1:, 1:], jnp.int32)
    if src_size != dst_size:
        # TODO(synk): bicubic rel-pos-table resize (F.interpolate mode='bicubic') not implemented.
        raise NotImplementedError("rel-pos bicubic interpolation path not implemented")
    vals = jnp.take(params["rel_pos_table"], rp_bucket, axis=0)   # (L, L, heads)
    return jnp.transpose(vals, (2, 0, 1))                         # (heads, L, L)


def init_params(key):
    ks = jax.random.split(key, 8)
    c4 = EMBED_DIM // 4
    p = {}
    p["conv1_w"] = 0.05 * jax.random.normal(ks[0], (c4, 3, 4, 4), jnp.float32)
    p["conv1_b"] = 0.05 * jax.random.normal(ks[1], (c4,), jnp.float32)
    p["ln1_g"] = jnp.ones((c4,), jnp.float32)
    p["ln1_b"] = jnp.zeros((c4,), jnp.float32)
    p["conv2_w"] = 0.05 * jax.random.normal(ks[2], (c4, c4, 2, 2), jnp.float32)
    p["conv2_b"] = 0.05 * jax.random.normal(ks[3], (c4,), jnp.float32)
    p["ln2_g"] = jnp.ones((c4,), jnp.float32)
    p["ln2_b"] = jnp.zeros((c4,), jnp.float32)
    p["conv3_w"] = 0.05 * jax.random.normal(ks[4], (EMBED_DIM, c4, 2, 2), jnp.float32)
    p["conv3_b"] = 0.05 * jax.random.normal(ks[5], (EMBED_DIM,), jnp.float32)
    scale = EMBED_DIM ** (-0.5)
    p["pos_embed"] = scale * jax.random.normal(ks[6], (BUCKET_SIZE ** 2 + 1, EMBED_DIM), jnp.float32)
    num_rel_pretrain = (2 * PRETRAIN_BUCKET_SIZE - 1) ** 2 + 3
    # Module zero-inits this table; use small random values so the gather is non-trivial.
    p["rel_pos_table"] = 0.05 * jax.random.normal(ks[7], (num_rel_pretrain, ATTENTION_HEADS), jnp.float32)
    return p


def image_adaptor_forward(x_nchw, params, packed=None):
    if packed is None:
        packed = pack_adaptor_params(params)

    x = jnp.transpose(x_nchw, (0, 2, 3, 1)).astype(jnp.float32)   # NCHW -> NHWC
    x2d, (B, n3h, n3w) = _hierarchical_patchify(x)                # (16*B*P3, 48)
    P3 = n3h * n3w
    assert P3 == BUCKET_SIZE ** 2, "pos_embed add requires h*w == bucket_size**2"

    # Single-step fused kernel: every input/output is one full-array VMEM block
    # (live footprint well under 1 MiB on v5e/v6e/v7x), so no grid / BlockSpec
    # tiling is needed and there is exactly one pipeline step.
    y = pl.pallas_call(
        _fused_embed_kernel,
        out_shape=jax.ShapeDtypeStruct((B, P3, EMBED_DIM), jnp.float32),
    )(x2d, packed["w1"], packed["w23"], packed["pvec"], packed["pos"])
    x_out = y.reshape(B, n3h, n3w, EMBED_DIM)

    bias = _get_rel_pos_bias(params, window=False)
    bias_window = _get_rel_pos_bias(params, window=True)
    return x_out, bias, bias_window


# ---------------------- pure-JAX reference (sanity) ----------------------
def _ref_embed(x_nchw, params):
    x = jnp.transpose(x_nchw, (0, 2, 3, 1)).astype(jnp.float32)

    def conv(x, w, b, k):
        wj = jnp.transpose(w, (2, 3, 1, 0))
        y = lax.conv_general_dilated(x, wj, (k, k), "VALID",
                                     dimension_numbers=("NHWC", "HWIO", "NHWC"))
        return y + b

    def ln(x, g, bta):
        m = jnp.mean(x, -1, keepdims=True)
        v = jnp.mean((x - m) ** 2, -1, keepdims=True)
        return (x - m) * lax.rsqrt(v + LN_EPS) * g + bta

    x = jax.nn.gelu(ln(conv(x, params["conv1_w"], params["conv1_b"], 4),
                       params["ln1_g"], params["ln1_b"]), approximate=False)
    x = jax.nn.gelu(ln(conv(x, params["conv2_w"], params["conv2_b"], 2),
                       params["ln2_g"], params["ln2_b"]), approximate=False)
    x = conv(x, params["conv3_w"], params["conv3_b"], 2)
    h, w = x.shape[1:3]
    return x + params["pos_embed"][1:].reshape(1, h, w, -1)


if __name__ == "__main__":
    key = jax.random.PRNGKey(0)
    pkey, xkey = jax.random.split(key)
    params = init_params(pkey)
    packed = pack_adaptor_params(params)          # one-time weight packing

    H_IN = BUCKET_SIZE * 16   # total conv stride is 16
    x = jax.random.normal(xkey, (2, 3, H_IN, H_IN), jnp.float32)

    fwd = jax.jit(image_adaptor_forward)
    out, bias, bias_window = fwd(x, params, packed)
    jax.block_until_ready((out, bias, bias_window))

    assert out.shape == (2, BUCKET_SIZE, BUCKET_SIZE, EMBED_DIM), out.shape
    L = BUCKET_SIZE ** 2
    Lw = WINDOW_SIZE ** 2
    assert bias.shape == (ATTENTION_HEADS, L, L), bias.shape
    assert bias_window.shape == (ATTENTION_HEADS, Lw, Lw), bias_window.shape

    ref = _ref_embed(x, params)
    if not jnp.allclose(out, ref, atol=1e-4, rtol=1e-4):
        raise AssertionError("Pallas embed_images output mismatch vs JAX reference")

    print("KERNEL_OK")
</pallas_src>

<mosaic_0001>
module attributes {stable_mosaic.version = 11 : i64} {
  func.func @_fused_embed_kernel(%arg0: memref<512x48xf32, #tpu.memory_space<vmem>>, %arg1: memref<48x8xf32, #tpu.memory_space<vmem>>, %arg2: memref<32x40xf32, #tpu.memory_space<vmem>>, %arg3: memref<7x32xf32, #tpu.memory_space<vmem>>, %arg4: memref<16x32xf32, #tpu.memory_space<vmem>>, %arg5: memref<2x16x32xf32, #tpu.memory_space<vmem>>) attributes {dimension_semantics = [], scalar_prefetch = 0 : i64, scratch_operands = 0 : i64, tpu.core_type = #tpu.core_type<tc>} {
    %c0 = arith.constant 0 : index
    %c0_0 = arith.constant 0 : index
    %0 = vector.load %arg3[%c0, %c0_0] : memref<7x32xf32, #tpu.memory_space<vmem>>, vector<7x32xf32>
    %1 = vector.extract_strided_slice %0 {offsets = [0, 0], sizes = [1, 8], strides = [1, 1]} : vector<7x32xf32> to vector<1x8xf32>
    %2 = vector.extract_strided_slice %0 {offsets = [1, 0], sizes = [1, 8], strides = [1, 1]} : vector<7x32xf32> to vector<1x8xf32>
    %3 = vector.extract_strided_slice %0 {offsets = [2, 0], sizes = [1, 8], strides = [1, 1]} : vector<7x32xf32> to vector<1x8xf32>
    %4 = vector.extract_strided_slice %0 {offsets = [3, 0], sizes = [1, 8], strides = [1, 1]} : vector<7x32xf32> to vector<1x8xf32>
    %5 = vector.extract_strided_slice %0 {offsets = [4, 0], sizes = [1, 8], strides = [1, 1]} : vector<7x32xf32> to vector<1x8xf32>
    %6 = vector.extract_strided_slice %0 {offsets = [5, 0], sizes = [1, 8], strides = [1, 1]} : vector<7x32xf32> to vector<1x8xf32>
    %7 = vector.extract_strided_slice %0 {offsets = [6, 0], sizes = [1, 32], strides = [1, 1]} : vector<7x32xf32> to vector<1x32xf32>
    %c0_1 = arith.constant 0 : index
    %c0_2 = arith.constant 0 : index
    %8 = vector.load %arg2[%c0_1, %c0_2] : memref<32x40xf32, #tpu.memory_space<vmem>>, vector<32x40xf32>
    %9 = vector.extract_strided_slice %8 {offsets = [0, 0], sizes = [32, 8], strides = [1, 1]} : vector<32x40xf32> to vector<32x8xf32>
    %10 = vector.extract_strided_slice %8 {offsets = [0, 8], sizes = [32, 32], strides = [1, 1]} : vector<32x40xf32> to vector<32x32xf32>
    %c0_3 = arith.constant 0 : index
    %c0_4 = arith.constant 0 : index
    %11 = vector.load %arg0[%c0_3, %c0_4] : memref<512x48xf32, #tpu.memory_space<vmem>>, vector<512x48xf32>
    %c0_5 = arith.constant 0 : index
    %c0_6 = arith.constant 0 : index
    %12 = vector.load %arg1[%c0_5, %c0_6] : memref<48x8xf32, #tpu.memory_space<vmem>>, vector<48x8xf32>
    %cst = arith.constant dense<0.000000e+00> : vector<512x8xf32>
    %13 = tpu.matmul %11, %12, %cst {dimension_numbers = #tpu.dot_dimension_numbers<[1], [0], [0], [1], [0, 0, 1, 1], [], []>} : vector<512x48xf32>, vector<48x8xf32>, vector<512x8xf32> -> vector<512x8xf32>
    %14 = vector.broadcast %1 : vector<1x8xf32> to vector<512x8xf32>
    %15 = arith.addf %13, %14 : vector<512x8xf32>
    %cst_7 = arith.constant dense<0.000000e+00> : vector<512xf32>
    %16 = vector.multi_reduction <add>, %15, %cst_7 [1] : vector<512x8xf32> to vector<512xf32>
    %17 = vector.shape_cast %16 : vector<512xf32> to vector<512x1xf32>
    %cst_8 = arith.constant 8.000000e+00 : f32
    %18 = vector.broadcast %cst_8 : f32 to vector<512x1xf32>
    %19 = arith.divf %17, %18 : vector<512x1xf32>
    %20 = vector.broadcast %19 : vector<512x1xf32> to vector<512x8xf32>
    %21 = arith.subf %15, %20 : vector<512x8xf32>
    %22 = arith.mulf %21, %21 : vector<512x8xf32>
    %cst_9 = arith.constant dense<0.000000e+00> : vector<512xf32>
    %23 = vector.multi_reduction <add>, %22, %cst_9 [1] : vector<512x8xf32> to vector<512xf32>
    %24 = vector.shape_cast %23 : vector<512xf32> to vector<512x1xf32>
    %cst_10 = arith.constant 8.000000e+00 : f32
    %25 = vector.broadcast %cst_10 : f32 to vector<512x1xf32>
    %26 = arith.divf %24, %25 : vector<512x1xf32>
    %27 = vector.broadcast %19 : vector<512x1xf32> to vector<512x8xf32>
    %28 = arith.subf %15, %27 : vector<512x8xf32>
    %cst_11 = arith.constant 9.99999974E-6 : f32
    %29 = vector.broadcast %cst_11 : f32 to vector<512x1xf32>
    %30 = arith.addf %26, %29 : vector<512x1xf32>
    %31 = math.rsqrt %30 : vector<512x1xf32>
    %32 = vector.broadcast %31 : vector<512x1xf32> to vector<512x8xf32>
    %33 = arith.mulf %28, %32 : vector<512x8xf32>
    %34 = vector.broadcast %2 : vector<1x8xf32> to vector<512x8xf32>
    %35 = arith.mulf %33, %34 : vector<512x8xf32>
    %36 = vector.broadcast %3 : vector<1x8xf32> to vector<512x8xf32>
    %37 = arith.addf %35, %36 : vector<512x8xf32>
    %cst_12 = arith.constant 5.000000e-01 : f32
    %38 = vector.broadcast %cst_12 : f32 to vector<512x8xf32>
    %39 = arith.mulf %38, %37 : vector<512x8xf32>
    %cst_13 = arith.constant 0.707106769 : f32
    %40 = vector.broadcast %cst_13 : f32 to vector<512x8xf32>
    %41 = arith.mulf %37, %40 : vector<512x8xf32>
    %42 = math.erf %41 : vector<512x8xf32>
    %cst_14 = arith.constant 1.000000e+00 : f32
    %43 = vector.broadcast %cst_14 : f32 to vector<512x8xf32>
    %44 = arith.addf %43, %42 : vector<512x8xf32>
    %45 = arith.mulf %39, %44 : vector<512x8xf32>
    %46 = vector.extract_strided_slice %45 {offsets = [0, 0], sizes = [128, 8], strides = [1, 1]} : vector<512x8xf32> to vector<128x8xf32>
    %47 = vector.extract_strided_slice %45 {offsets = [128, 0], sizes = [128, 8], strides = [1, 1]} : vector<512x8xf32> to vector<128x8xf32>
    %48 = vector.extract_strided_slice %45 {offsets = [256, 0], sizes = [128, 8], strides = [1, 1]} : vector<512x8xf32> to vector<128x8xf32>
    %49 = vector.extract_strided_slice %45 {offsets = [384, 0], sizes = [128, 8], strides = [1, 1]} : vector<512x8xf32> to vector<128x8xf32>
    %50 = tpu.concatenate %46, %47, %48, %49 in 1 : vector<128x8xf32>, vector<128x8xf32>, vector<128x8xf32>, vector<128x8xf32> -> vector<128x32xf32>
    %cst_15 = arith.constant dense<0.000000e+00> : vector<128x8xf32>
    %51 = tpu.matmul %50, %9, %cst_15 {dimension_numbers = #tpu.dot_dimension_numbers<[1], [0], [0], [1], [0, 0, 1, 1], [], []>} : vector<128x32xf32>, vector<32x8xf32>, vector<128x8xf32> -> vector<128x8xf32>
    %52 = vector.broadcast %4 : vector<1x8xf32> to vector<128x8xf32>
    %53 = arith.addf %51, %52 : vector<128x8xf32>
    %cst_16 = arith.constant dense<0.000000e+00> : vector<128xf32>
    %54 = vector.multi_reduction <add>, %53, %cst_16 [1] : vector<128x8xf32> to vector<128xf32>
    %55 = vector.shape_cast %54 : vector<128xf32> to vector<128x1xf32>
    %cst_17 = arith.constant 8.000000e+00 : f32
    %56 = vector.broadcast %cst_17 : f32 to vector<128x1xf32>
    %57 = arith.divf %55, %56 : vector<128x1xf32>
    %58 = vector.broadcast %57 : vector<128x1xf32> to vector<128x8xf32>
    %59 = arith.subf %53, %58 : vector<128x8xf32>
    %60 = arith.mulf %59, %59 : vector<128x8xf32>
    %cst_18 = arith.constant dense<0.000000e+00> : vector<128xf32>
    %61 = vector.multi_reduction <add>, %60, %cst_18 [1] : vector<128x8xf32> to vector<128xf32>
    %62 = vector.shape_cast %61 : vector<128xf32> to vector<128x1xf32>
    %cst_19 = arith.constant 8.000000e+00 : f32
    %63 = vector.broadcast %cst_19 : f32 to vector<128x1xf32>
    %64 = arith.divf %62, %63 : vector<128x1xf32>
    %65 = vector.broadcast %57 : vector<128x1xf32> to vector<128x8xf32>
    %66 = arith.subf %53, %65 : vector<128x8xf32>
    %cst_20 = arith.constant 9.99999974E-6 : f32
    %67 = vector.broadcast %cst_20 : f32 to vector<128x1xf32>
    %68 = arith.addf %64, %67 : vector<128x1xf32>
    %69 = math.rsqrt %68 : vector<128x1xf32>
    %70 = vector.broadcast %69 : vector<128x1xf32> to vector<128x8xf32>
    %71 = arith.mulf %66, %70 : vector<128x8xf32>
    %72 = vector.broadcast %5 : vector<1x8xf32> to vector<128x8xf32>
    %73 = arith.mulf %71, %72 : vector<128x8xf32>
    %74 = vector.broadcast %6 : vector<1x8xf32> to vector<128x8xf32>
    %75 = arith.addf %73, %74 : vector<128x8xf32>
    %cst_21 = arith.constant 5.000000e-01 : f32
    %76 = vector.broadcast %cst_21 : f32 to vector<128x8xf32>
    %77 = arith.mulf %76, %75 : vector<128x8xf32>
    %cst_22 = arith.constant 0.707106769 : f32
    %78 = vector.broadcast %cst_22 : f32 to vector<128x8xf32>
    %79 = arith.mulf %75, %78 : vector<128x8xf32>
    %80 = math.erf %79 : vector<128x8xf32>
    %cst_23 = arith.constant 1.000000e+00 : f32
    %81 = vector.broadcast %cst_23 : f32 to vector<128x8xf32>
    %82 = arith.addf %81, %80 : vector<128x8xf32>
    %83 = arith.mulf %77, %82 : vector<128x8xf32>
    %84 = vector.extract_strided_slice %83 {offsets = [0, 0], sizes = [32, 8], strides = [1, 1]} : vector<128x8xf32> to vector<32x8xf32>
    %85 = vector.extract_strided_slice %83 {offsets = [32, 0], sizes = [32, 8], strides = [1, 1]} : vector<128x8xf32> to vector<32x8xf32>
    %86 = vector.extract_strided_slice %83 {offsets = [64, 0], sizes = [32, 8], strides = [1, 1]} : vector<128x8xf32> to vector<32x8xf32>
    %87 = vector.extract_strided_slice %83 {offsets = [96, 0], sizes = [32, 8], strides = [1, 1]} : vector<128x8xf32> to vector<32x8xf32>
    %88 = tpu.concatenate %84, %85, %86, %87 in 1 : vector<32x8xf32>, vector<32x8xf32>, vector<32x8xf32>, vector<32x8xf32> -> vector<32x32xf32>
    %cst_24 = arith.constant dense<0.000000e+00> : vector<32x32xf32>
    %89 = tpu.matmul %88, %10, %cst_24 {dimension_numbers = #tpu.dot_dimension_numbers<[1], [0], [0], [1], [0, 0, 1, 1], [], []>} : vector<32x32xf32>, vector<32x32xf32>, vector<32x32xf32> -> vector<32x32xf32>
    %90 = vector.broadcast %7 : vector<1x32xf32> to vector<32x32xf32>
    %91 = arith.addf %89, %90 : vector<32x32xf32>
    %c0_25 = arith.constant 0 : index
    %c0_26 = arith.constant 0 : index
    %92 = vector.load %arg4[%c0_25, %c0_26] : memref<16x32xf32, #tpu.memory_space<vmem>>, vector<16x32xf32>
    %93 = vector.extract_strided_slice %91 {offsets = [0, 0], sizes = [16, 32], strides = [1, 1]} : vector<32x32xf32> to vector<16x32xf32>
    %94 = arith.addf %93, %92 : vector<16x32xf32>
    %c0_27 = arith.constant 0 : index
    %c0_28 = arith.constant 0 : index
    %c0_29 = arith.constant 0 : index
    %95 = vector.load %arg5[%c0_27, %c0_28, %c0_29] : memref<2x16x32xf32, #tpu.memory_space<vmem>>, vector<1x16x32xf32>
    %96 = vector.shape_cast %95 : vector<1x16x32xf32> to vector<16x32xf32>
    %97 = vector.shape_cast %94 : vector<16x32xf32> to vector<1x16x32xf32>
    tpu.vector_store %arg5[%c0_27, %c0_28, %c0_29], %97 {strides = array<i32>} : memref<2x16x32xf32, #tpu.memory_space<vmem>>, vector<1x16x32xf32>,
    %98 = vector.extract_strided_slice %91 {offsets = [16, 0], sizes = [16, 32], strides = [1, 1]} : vector<32x32xf32> to vector<16x32xf32>
    %99 = arith.addf %98, %92 : vector<16x32xf32>
    %c1 = arith.constant 1 : index
    %c0_30 = arith.constant 0 : index
    %c0_31 = arith.constant 0 : index
    %100 = vector.load %arg5[%c1, %c0_30, %c0_31] : memref<2x16x32xf32, #tpu.memory_space<vmem>>, vector<1x16x32xf32>
    %101 = vector.shape_cast %100 : vector<1x16x32xf32> to vector<16x32xf32>
    %102 = vector.shape_cast %99 : vector<16x32xf32> to vector<1x16x32xf32>
    tpu.vector_store %arg5[%c1, %c0_30, %c0_31], %102 {strides = array<i32>} : memref<2x16x32xf32, #tpu.memory_space<vmem>>, vector<1x16x32xf32>,
    return
  }
}

</mosaic_0001>

<llo_original>
// kernel: image_adaptor_forward.1
$region0: #{image_adaptor_forward.1}
  #allocation0 [shape = 'u32[]', space=smem, size = 0x4, offset = 0x4, fixed_abs, tag = 'smem constant byte address 0x4 - core index']
  #allocation1 [shape = 'u32[144,128]{1,0:T(1,128)}', space=vmem, size = 0x12000, scoped, tag = 'internal scratch']
  %s0 = inlined_call_operand.vmem [shape: f32[512,48], index: 0, kind: input, shape index: {}]
  %s1 = inlined_call_operand.vmem [shape: f32[48,8], index: 1, kind: input, shape index: {}]
  %s2 = inlined_call_operand.vmem [shape: f32[32,40], index: 2, kind: input, shape index: {}]
  %s3 = inlined_call_operand.vmem [shape: f32[7,32], index: 3, kind: input, shape index: {}]
  %s4 = inlined_call_operand.vmem [shape: f32[16,32], index: 4, kind: input, shape index: {}]
  %s5 = inlined_call_operand.hbm [shape: f32[2,16,32], index: 5, kind: output, shape index: {}]
  %s6 = sld [smem:[#allocation0]]
  $region30: #{image_adaptor_forward.1} parent=0
    _
  %s8 = ssub.s32 1, %s6
  %s9 = scalar_select 0, %s8, %s6
  $region1: #{image_adaptor_forward.1} parent=0
    #allocation2 [shape = 'u8[16384]{0}', space=vmem, size = 0x4000, scoped, tag = 'output window, operand 0, single buffered']
    #allocation3 [shape = 's32[1]{0}', space=sflag, size = 0x4, scoped, tag = 'scoped memory for image_adaptor_forward.1']
    %10 = vsyncpa [#allocation3], 0
    // Predicated region
    $region2: #{image_adaptor_forward.1} parent=1 // pred_check
      _
    $region3: #{image_adaptor_forward.1} parent=1 // pred_check_branch
      %12 = sbr.rel (0) target = $region5
    $region4: #{image_adaptor_forward.1} parent=1 // pred_region
      _
    $region5: #{image_adaptor_forward.1} parent=1 // pred_fallthru
      _
    // Predicated region
    $region6: #{image_adaptor_forward.1} parent=1 // pred_check
      _
    $region7: #{image_adaptor_forward.1} parent=1 // pred_check_branch
      %14 = sbr.rel (0) target = $region9
    $region8: #{image_adaptor_forward.1} parent=1 // pred_region
      _
    $region9: #{image_adaptor_forward.1} parent=1 // pred_fallthru
      _
    // Predicated region
    $region10: #{image_adaptor_forward.1} parent=1 // pred_check
      _
    $region11: #{image_adaptor_forward.1} parent=1 // pred_check_branch
      %16 = sbr.rel (0) target = $region13
    $region12: #{image_adaptor_forward.1} parent=1 // pred_region
      _
    $region13: #{image_adaptor_forward.1} parent=1 // pred_fallthru
      _
    // Predicated region
    $region14: #{image_adaptor_forward.1} parent=1 // pred_check
      _
    $region15: #{image_adaptor_forward.1} parent=1 // pred_check_branch
      %18 = sbr.rel (0) target = $region17
    $region16: #{image_adaptor_forward.1} parent=1 // pred_region
      _
    $region17: #{image_adaptor_forward.1} parent=1 // pred_fallthru
      _
    // Predicated region
    $region18: #{image_adaptor_forward.1} parent=1 // pred_check
      _
    $region19: #{image_adaptor_forward.1} parent=1 // pred_check_branch
      %20 = sbr.rel (0) target = $region21
    $region20: #{image_adaptor_forward.1} parent=1 // pred_region
      _
    $region21: #{image_adaptor_forward.1} parent=1 // pred_fallthru
      _
    %v21 = vld [vmem:[%s3] sm:$0x7f]
    %v22 = vld [vmem:[%s2] sm:$0xff]
    %v23 = vld [vmem:[%s2 + $0x8] sm:$0xff]
    %v24 = vld [vmem:[%s2 + $0x10] sm:$0xff]
    %v25 = vld [vmem:[%s2 + $0x18] sm:$0xff]
    %v26 = vld [vmem:[%s0] sm:$0xff]
    %v27 = vld [vmem:[%s0 + $0x8] sm:$0xff]
    %v28 = vld [vmem:[%s0 + $0x10] sm:$0xff]
    %v29 = vld [vmem:[%s0 + $0x18] sm:$0xff]
    %v30 = vld [vmem:[%s0 + $0x20] sm:$0xff]
    %v31 = vld [vmem:[%s0 + $0x28] sm:$0xff]
    %v32 = vld [vmem:[%s0 + $0x30] sm:$0xff]
    %v33 = vld [vmem:[%s0 + $0x38] sm:$0xff]
    %v34 = vld [vmem:[%s0 + $0x40] sm:$0xff]
    %v35 = vld [vmem:[%s0 + $0x48] sm:$0xff]
    %v36 = vld [vmem:[%s0 + $0x50] sm:$0xff]
    %v37 = vld [vmem:[%s0 + $0x58] sm:$0xff]
    %v38 = vld [vmem:[%s0 + $0x60] sm:$0xff]
    %v39 = vld [vmem:[%s0 + $0x68] sm:$0xff]
    %v40 = vld [vmem:[%s0 + $0x70] sm:$0xff]
    %v41 = vld [vmem:[%s0 + $0x78] sm:$0xff]
    %v42 = vld [vmem:[%s0 + $0x80] sm:$0xff]
    %v43 = vld [vmem:[%s0 + $0x88] sm:$0xff]
    %v44 = vld [vmem:[%s0 + $0x90] sm:$0xff]
    %v45 = vld [vmem:[%s0 + $0x98] sm:$0xff]
    %v46 = vld [vmem:[%s0 + $0xa0] sm:$0xff]
    %v47 = vld [vmem:[%s0 + $0xa8] sm:$0xff]
    %v48 = vld [vmem:[%s0 + $0xb0] sm:$0xff]
    %v49 = vld [vmem:[%s0 + $0xb8] sm:$0xff]
    %v50 = vld [vmem:[%s0 + $0xc0] sm:$0xff]
    %v51 = vld [vmem:[%s0 + $0xc8] sm:$0xff]
    %v52 = vld [vmem:[%s0 + $0xd0] sm:$0xff]
    %v53 = vld [vmem:[%s0 + $0xd8] sm:$0xff]
    %v54 = vld [vmem:[%s0 + $0xe0] sm:$0xff]
    %v55 = vld [vmem:[%s0 + $0xe8] sm:$0xff]
    %v56 = vld [vmem:[%s0 + $0xf0] sm:$0xff]
    %v57 = vld [vmem:[%s0 + $0xf8] sm:$0xff]
    %v58 = vld [vmem:[%s0 + $0x100] sm:$0xff]
    %v59 = vld [vmem:[%s0 + $0x108] sm:$0xff]
    %v60 = vld [vmem:[%s0 + $0x110] sm:$0xff]
    %v61 = vld [vmem:[%s0 + $0x118] sm:$0xff]
    %v62 = vld [vmem:[%s0 + $0x120] sm:$0xff]
    %v63 = vld [vmem:[%s0 + $0x128] sm:$0xff]
    %v64 = vld [vmem:[%s0 + $0x130] sm:$0xff]
    %v65 = vld [vmem:[%s0 + $0x138] sm:$0xff]
    %v66 = vld [vmem:[%s0 + $0x140] sm:$0xff]
    %v67 = vld [vmem:[%s0 + $0x148] sm:$0xff]
    %v68 = vld [vmem:[%s0 + $0x150] sm:$0xff]
    %v69 = vld [vmem:[%s0 + $0x158] sm:$0xff]
    %v70 = vld [vmem:[%s0 + $0x160] sm:$0xff]
    %v71 = vld [vmem:[%s0 + $0x168] sm:$0xff]
    %v72 = vld [vmem:[%s0 + $0x170] sm:$0xff]
    %v73 = vld [vmem:[%s0 + $0x178] sm:$0xff]
    %v74 = vld [vmem:[%s0 + $0x180] sm:$0xff]
    %v75 = vld [vmem:[%s0 + $0x188] sm:$0xff]
    %v76 = vld [vmem:[%s0 + $0x190] sm:$0xff]
    %v77 = vld [vmem:[%s0 + $0x198] sm:$0xff]
    %v78 = vld [vmem:[%s0 + $0x1a0] sm:$0xff]
    %v79 = vld [vmem:[%s0 + $0x1a8] sm:$0xff]
    %v80 = vld [vmem:[%s0 + $0x1b0] sm:$0xff]
    %v81 = vld [vmem:[%s0 + $0x1b8] sm:$0xff]
    %v82 = vld [vmem:[%s0 + $0x1c0] sm:$0xff]
    %v83 = vld [vmem:[%s0 + $0x1c8] sm:$0xff]
    %v84 = vld [vmem:[%s0 + $0x1d0] sm:$0xff]
    %v85 = vld [vmem:[%s0 + $0x1d8] sm:$0xff]
    %v86 = vld [vmem:[%s0 + $0x1e0] sm:$0xff]
    %v87 = vld [vmem:[%s0 + $0x1e8] sm:$0xff]
    %v88 = vld [vmem:[%s0 + $0x1f0] sm:$0xff]
    %v89 = vld [vmem:[%s0 + $0x1f8] sm:$0xff]
    %v90 = vld [vmem:[%s1] sm:$0xff]
    %v91 = vld [vmem:[%s1 + $0x8] sm:$0xff]
    %v92 = vld [vmem:[%s1 + $0x10] sm:$0xff]
    %v93 = vld [vmem:[%s1 + $0x18] sm:$0xff]
    %v94 = vld [vmem:[%s1 + $0x20] sm:$0xff]
    %v95 = vld [vmem:[%s1 + $0x28] sm:$0xff]
    %v96 = vlaneseq
    %v97 = vshrl.u32 %v96, 7
    %v98 = vsub.s32 0, %v97
    %v99 = vrot.slane %v21, %v98
    %vm100 = vcmask 392192
    %v102 = vsel %vm100, %v26, 0
    %v105 = vsel %vm100, %v27, 0
    %v108 = vsel %vm100, %v28, 0
    %v111 = vsel %vm100, %v29, 0
    %v114 = vsel %vm100, %v30, 0
    %v117 = vsel %vm100, %v31, 0
    %v120 = vsel %vm100, %v32, 0
    %v123 = vsel %vm100, %v33, 0
    %v126 = vsel %vm100, %v34, 0
    %v129 = vsel %vm100, %v35, 0
    %v132 = vsel %vm100, %v36, 0
    %v135 = vsel %vm100, %v37, 0
    %v138 = vsel %vm100, %v38, 0
    %v141 = vsel %vm100, %v39, 0
    %v144 = vsel %vm100, %v40, 0
    %v147 = vsel %vm100, %v41, 0
    %v150 = vsel %vm100, %v42, 0
    %v153 = vsel %vm100, %v43, 0
    %v156 = vsel %vm100, %v44, 0
    %v159 = vsel %vm100, %v45, 0
    %v162 = vsel %vm100, %v46, 0
    %v165 = vsel %vm100, %v47, 0
    %v168 = vsel %vm100, %v48, 0
    %v171 = vsel %vm100, %v49, 0
    %v174 = vsel %vm100, %v50, 0
    %v177 = vsel %vm100, %v51, 0
    %v180 = vsel %vm100, %v52, 0
    %v183 = vsel %vm100, %v53, 0
    %v186 = vsel %vm100, %v54, 0
    %v189 = vsel %vm100, %v55, 0
    %v192 = vsel %vm100, %v56, 0
    %v195 = vsel %vm100, %v57, 0
    %v198 = vsel %vm100, %v58, 0
    %v201 = vsel %vm100, %v59, 0
    %v204 = vsel %vm100, %v60, 0
    %v207 = vsel %vm100, %v61, 0
    %v210 = vsel %vm100, %v62, 0
    %v213 = vsel %vm100, %v63, 0
    %v216 = vsel %vm100, %v64, 0
    %v219 = vsel %vm100, %v65, 0
    %v222 = vsel %vm100, %v66, 0
    %v225 = vsel %vm100, %v67, 0
    %v228 = vsel %vm100, %v68, 0
    %v231 = vsel %vm100, %v69, 0
    %v234 = vsel %vm100, %v70, 0
    %v237 = vsel %vm100, %v71, 0
    %v240 = vsel %vm100, %v72, 0
    %v243 = vsel %vm100, %v73, 0
    %v246 = vsel %vm100, %v74, 0
    %v249 = vsel %vm100, %v75, 0
    %v252 = vsel %vm100, %v76, 0
    %v255 = vsel %vm100, %v77, 0
    %v258 = vsel %vm100, %v78, 0
    %v261 = vsel %vm100, %v79, 0
    %v264 = vsel %vm100, %v80, 0
    %v267 = vsel %vm100, %v81, 0
    %v270 = vsel %vm100, %v82, 0
    %v273 = vsel %vm100, %v83, 0
    %v276 = vsel %vm100, %v84, 0
    %v279 = vsel %vm100, %v85, 0
    %v282 = vsel %vm100, %v86, 0
    %v285 = vsel %vm100, %v87, 0
    %v288 = vsel %vm100, %v88, 0
    %v291 = vsel %vm100, %v89, 0
    %293 = vmatprep.subr.mxu0 0.0
    %294 = vmatpush1.msra.mxu0 %v90
    %295 = vmatprep.subr.mxu0 0.0
    %296 = vmatpush1.msra.mxu0 %v91
    %297 = vmatprep.subr.mxu0 0.0
    %298 = vmatpush1.msra.mxu0 %v92
    %299 = vmatprep.subr.mxu0 0.0
    %300 = vmatpush1.msra.mxu0 %v93
    %301 = vmatprep.subr.mxu0 0.0
    %302 = vmatpush1.msra.mxu0 %v94
    %303 = vmatprep.subr.mxu0 0.0
    %304 = vmatpush1.msra.mxu0 %v95
    %305 = vmatprep.subr.mxu0 0.0
    %306 = vmatpush1.msra.mxu0 0.0
    %307 = vmatprep.subr.mxu0 0.0
    %308 = vmatpush1.msra.mxu0 0.0
    %309 = vmatprep.subr.mxu0 0.0
    %310 = vmatpush1.msra.mxu0 0.0
    %311 = vmatprep.subr.mxu0 0.0
    %312 = vmatpush1.msra.mxu0 0.0
    %313 = vmatprep.subr.mxu0 0.0
    %314 = vmatpush1.msra.mxu0 0.0
    %315 = vmatprep.subr.mxu0 0.0
    %316 = vmatpush1.msra.mxu0 0.0
    %317 = vmatprep.subr.mxu0 0.0
    %318 = vmatpush1.msra.mxu0 0.0
    %319 = vmatprep.subr.mxu0 0.0
    %320 = vmatpush1.msra.mxu0 0.0
    %321 = vmatprep.subr.mxu0 0.0
    %322 = vmatpush1.msra.mxu0 0.0
    %323 = vmatprep.subr.mxu0 0.0
    %324 = vmatpush1.msra.mxu0 0.0
    %325 = vmatprep.subr.mxu0 0.0
    %326 = vmatpush1.msra.mxu0 0.0
    %327 = vmatprep.subr.mxu0 0.0
    %328 = vmatpush1.msra.mxu0 0.0
    %329 = vmatprep.subr.mxu0 0.0
    %330 = vmatpush1.msra.mxu0 0.0
    %331 = vmatprep.subr.mxu0 0.0
    %332 = vmatpush1.msra.mxu0 0.0
    %333 = vmatprep.subr.mxu0 0.0
    %334 = vmatpush1.msra.mxu0 0.0
    %335 = vmatprep.subr.mxu0 0.0
    %336 = vmatpush1.msra.mxu0 0.0
    %337 = vmatprep.subr.mxu0 0.0
    %338 = vmatpush1.msra.mxu0 0.0
    %339 = vmatprep.subr.mxu0 0.0
    %340 = vmatpush1.msra.mxu0 0.0
    %341 = vmatprep.subr.mxu0 0.0
    %342 = vmatpush1.msra.mxu0 0.0
    %343 = vmatprep.subr.mxu0 0.0
    %344 = vmatpush1.msra.mxu0 0.0
    %345 = vmatprep.subr.mxu0 0.0
    %346 = vmatpush1.msra.mxu0 0.0
    %347 = vmatprep.subr.mxu0 0.0
    %348 = vmatpush1.msra.mxu0 0.0
    %349 = vmatprep.subr.mxu0 0.0
    %350 = vmatpush1.msra.mxu0 0.0
    %351 = vmatprep.subr.mxu0 0.0
    %352 = vmatpush1.msra.mxu0 0.0
    %353 = vmatprep.subr.mxu0 0.0
    %354 = vmatpush1.msra.mxu0 0.0
    %355 = vmatprep.subr.mxu0 0.0
    %356 = vmatpush1.msra.mxu0 0.0
    %357 = vmatprep.mubr.f32.mxu0 0.0
    %358 = vmatmul.mubr.f32.gmra.mrb[0].mxu0 %v102
    %v359 = vpop.f32.mrb[0].mxu0
    %v360 = vadd.f32 %v99, %v359
    %v361 = vpop.f32.mrb[0].mxu0
    %362 = vmatprep.mubr.f32.mxu0 0.0
    %363 = vmatmul.mubr.f32.gmra.mrb[0].mxu0 %v105
    %v364 = vpop.f32.mrb[0].mxu0
    %v365 = vadd.f32 %v99, %v364
    %v366 = vpop.f32.mrb[0].mxu0
    %367 = vmatprep.mubr.f32.mxu0 0.0
    %368 = vmatmul.mubr.f32.gmra.mrb[0].mxu0 %v108
    %v369 = vpop.f32.mrb[0].mxu0
    %v370 = vadd.f32 %v99, %v369
    %v371 = vpop.f32.mrb[0].mxu0
    %372 = vmatprep.mubr.f32.mxu0 0.0
    %373 = vmatmul.mubr.f32.gmra.mrb[0].mxu0 %v111
    %v374 = vpop.f32.mrb[0].mxu0
    %v375 = vadd.f32 %v99, %v374
    %v376 = vpop.f32.mrb[0].mxu0
    %377 = vmatprep.mubr.f32.mxu0 0.0
    %378 = vmatmul.mubr.f32.gmra.mrb[0].mxu0 %v114
    %v379 = vpop.f32.mrb[0].mxu0
    %v380 = vadd.f32 %v99, %v379
    %v381 = vpop.f32.mrb[0].mxu0
    %382 = vmatprep.mubr.f32.mxu0 0.0
    %383 = vmatmul.mubr.f32.gmra.mrb[0].mxu0 %v117
    %v384 = vpop.f32.mrb[0].mxu0
    %v385 = vadd.f32 %v99, %v384
    %v386 = vpop.f32.mrb[0].mxu0
    %387 = vmatprep.mubr.f32.mxu0 0.0
    %388 = vmatmul.mubr.f32.gmra.mrb[0].mxu0 %v120
    %v389 = vpop.f32.mrb[0].mxu0
    %v390 = vadd.f32 %v99, %v389
    %v391 = vpop.f32.mrb[0].mxu0
    %392 = vmatprep.mubr.f32.mxu0 0.0
    %393 = vmatmul.mubr.f32.gmra.mrb[0].mxu0 %v123
    %v394 = vpop.f32.mrb[0].mxu0
    %v395 = vadd.f32 %v99, %v394
    %v396 = vpop.f32.mrb[0].mxu0
    %397 = vmatprep.mubr.f32.mxu0 0.0
    %398 = vmatmul.mubr.f32.gmra.mrb[0].mxu0 %v126
    %v399 = vpop.f32.mrb[0].mxu0
    %v400 = vadd.f32 %v99, %v399
    %v401 = vpop.f32.mrb[0].mxu0
    %402 = vmatprep.mubr.f32.mxu0 0.0
    %403 = vmatmul.mubr.f32.gmra.mrb[0].mxu0 %v129
    %v404 = vpop.f32.mrb[0].mxu0
    %v405 = vadd.f32 %v99, %v404
    %v406 = vpop.f32.mrb[0].mxu0
    %407 = vmatprep.mubr.f32.mxu0 0.0
    %408 = vmatmul.mubr.f32.gmra.mrb[0].mxu0 %v132
    %v409 = vpop.f32.mrb[0].mxu0
    %v410 = vadd.f32 %v99, %v409
    %v411 = vpop.f32.mrb[0].mxu0
    %412 = vmatprep.mubr.f32.mxu0 0.0
    %413 = vmatmul.mubr.f32.gmra.mrb[0].mxu0 %v135
    %v414 = vpop.f32.mrb[0].mxu0
    %v415 = vadd.f32 %v99, %v414
    %v416 = vpop.f32.mrb[0].mxu0
    %417 = vmatprep.mubr.f32.mxu0 0.0
    %418 = vmatmul.mubr.f32.gmra.mrb[0].mxu0 %v138
    %v419 = vpop.f32.mrb[0].mxu0
    %v420 = vadd.f32 %v99, %v419
    %v421 = vpop.f32.mrb[0].mxu0
    %422 = vmatprep.mubr.f32.mxu0 0.0
    %423 = vmatmul.mubr.f32.gmra.mrb[0].mxu0 %v141
    %v424 = vpop.f32.mrb[0].mxu0
    %v425 = vadd.f32 %v99, %v424
    %v426 = vpop.f32.mrb[0].mxu0
    %427 = vmatprep.mubr.f32.mxu0 0.0
    %428 = vmatmul.mubr.f32.gmra.mrb[0].mxu0 %v144
    %v429 = vpop.f32.mrb[0].mxu0
    %v430 = vadd.f32 %v99, %v429
    %v431 = vpop.f32.mrb[0].mxu0
    %432 = vmatprep.mubr.f32.mxu0 0.0
    %433 = vmatmul.mubr.f32.gmra.mrb[0].mxu0 %v147
    %v434 = vpop.f32.mrb[0].mxu0
    %v435 = vadd.f32 %v99, %v434
    %v436 = vpop.f32.mrb[0].mxu0
    %437 = vmatprep.mubr.f32.mxu0 0.0
    %438 = vmatmul.mubr.f32.gmra.mrb[0].mxu0 %v150
    %v439 = vpop.f32.mrb[0].mxu0
    %v440 = vadd.f32 %v99, %v439
    %v441 = vpop.f32.mrb[0].mxu0
    %442 = vmatprep.mubr.f32.mxu0 0.0
    %443 = vmatmul.mubr.f32.gmra.mrb[0].mxu0 %v153
    %v444 = vpop.f32.mrb[0].mxu0
    %v445 = vadd.f32 %v99, %v444
    %v446 = vpop.f32.mrb[0].mxu0
    %447 = vmatprep.mubr.f32.mxu0 0.0
    %448 = vmatmul.mubr.f32.gmra.mrb[0].mxu0 %v156
    %v449 = vpop.f32.mrb[0].mxu0
    %v450 = vadd.f32 %v99, %v449
    %v451 = vpop.f32.mrb[0].mxu0
    %452 = vmatprep.mubr.f32.mxu0 0.0
    %453 = vmatmul.mubr.f32.gmra.mrb[0].mxu0 %v159
    %v454 = vpop.f32.mrb[0].mxu0
    %v455 = vadd.f32 %v99, %v454
    %v456 = vpop.f32.mrb[0].mxu0
    %457 = vmatprep.mubr.f32.mxu0 0.0
    %458 = vmatmul.mubr.f32.gmra.mrb[0].mxu0 %v162
    %v459 = vpop.f32.mrb[0].mxu0
    %v460 = vadd.f32 %v99, %v459
    %v461 = vpop.f32.mrb[0].mxu0
    %462 = vmatprep.mubr.f32.mxu0 0.0
    %463 = vmatmul.mubr.f32.gmra.mrb[0].mxu0 %v165
    %v464 = vpop.f32.mrb[0].mxu0
    %v465 = vadd.f32 %v99, %v464
    %v466 = vpop.f32.mrb[0].mxu0
    %467 = vmatprep.mubr.f32.mxu0 0.0
    %468 = vmatmul.mubr.f32.gmra.mrb[0].mxu0 %v168
    %v469 = vpop.f32.mrb[0].mxu0
    %v470 = vadd.f32 %v99, %v469
    %v471 = vpop.f32.mrb[0].mxu0
    %472 = vmatprep.mubr.f32.mxu0 0.0
    %473 = vmatmul.mubr.f32.gmra.mrb[0].mxu0 %v171
    %v474 = vpop.f32.mrb[0].mxu0
    %v475 = vadd.f32 %v99, %v474
    %v476 = vpop.f32.mrb[0].mxu0
    %477 = vmatprep.mubr.f32.mxu0 0.0
    %478 = vmatmul.mubr.f32.gmra.mrb[0].mxu0 %v174
    %v479 = vpop.f32.mrb[0].mxu0
    %v480 = vadd.f32 %v99, %v479
    %v481 = vpop.f32.mrb[0].mxu0
    %482 = vmatprep.mubr.f32.mxu0 0.0
    %483 = vmatmul.mubr.f32.gmra.mrb[0].mxu0 %v177
    %v484 = vpop.f32.mrb[0].mxu0
    %v485 = vadd.f32 %v99, %v484
    %v486 = vpop.f32.mrb[0].mxu0
    %487 = vmatprep.mubr.f32.mxu0 0.0
    %488 = vmatmul.mubr.f32.gmra.mrb[0].mxu0 %v180
    %v489 = vpop.f32.mrb[0].mxu0
    %v490 = vadd.f32 %v99, %v489
    %v491 = vpop.f32.mrb[0].mxu0
    %492 = vmatprep.mubr.f32.mxu0 0.0
    %493 = vmatmul.mubr.f32.gmra.mrb[0].mxu0 %v183
    %v494 = vpop.f32.mrb[0].mxu0
    %v495 = vadd.f32 %v99, %v494
    %v496 = vpop.f32.mrb[0].mxu0
    %497 = vmatprep.mubr.f32.mxu0 0.0
    %498 = vmatmul.mubr.f32.gmra.mrb[0].mxu0 %v186
    %v499 = vpop.f32.mrb[0].mxu0
    %v500 = vadd.f32 %v99, %v499
    %v501 = vpop.f32.mrb[0].mxu0
    %502 = vmatprep.mubr.f32.mxu0 0.0
    %503 = vmatmul.mubr.f32.gmra.mrb[0].mxu0 %v189
    %v504 = vpop.f32.mrb[0].mxu0
    %v505 = vadd.f32 %v99, %v504
    %v506 = vpop.f32.mrb[0].mxu0
    %507 = vmatprep.mubr.f32.mxu0 0.0
    %508 = vmatmul.mubr.f32.gmra.mrb[0].mxu0 %v192
    %v509 = vpop.f32.mrb[0].mxu0
    %v510 = vadd.f32 %v99, %v509
    %v511 = vpop.f32.mrb[0].mxu0
    %512 = vmatprep.mubr.f32.mxu0 0.0
    %513 = vmatmul.mubr.f32.gmra.mrb[0].mxu0 %v195
    %v514 = vpop.f32.mrb[0].mxu0
    %v515 = vadd.f32 %v99, %v514
    %v516 = vpop.f32.mrb[0].mxu0
    %517 = vmatprep.mubr.f32.mxu0 0.0
    %518 = vmatmul.mubr.f32.gmra.mrb[0].mxu0 %v198
    %v519 = vpop.f32.mrb[0].mxu0
    %v520 = vadd.f32 %v99, %v519
    %v521 = vpop.f32.mrb[0].mxu0
    %522 = vmatprep.mubr.f32.mxu0 0.0
    %523 = vmatmul.mubr.f32.gmra.mrb[0].mxu0 %v201
    %v524 = vpop.f32.mrb[0].mxu0
    %v525 = vadd.f32 %v99, %v524
    %v526 = vpop.f32.mrb[0].mxu0
    %527 = vmatprep.mubr.f32.mxu0 0.0
    %528 = vmatmul.mubr.f32.gmra.mrb[0].mxu0 %v204
    %v529 = vpop.f32.mrb[0].mxu0
    %v530 = vadd.f32 %v99, %v529
    %v531 = vpop.f32.mrb[0].mxu0
    %532 = vmatprep.mubr.f32.mxu0 0.0
    %533 = vmatmul.mubr.f32.gmra.mrb[0].mxu0 %v207
    %v534 = vpop.f32.mrb[0].mxu0
    %v535 = vadd.f32 %v99, %v534
    %v536 = vpop.f32.mrb[0].mxu0
    %537 = vmatprep.mubr.f32.mxu0 0.0
    %538 = vmatmul.mubr.f32.gmra.mrb[0].mxu0 %v210
    %v539 = vpop.f32.mrb[0].mxu0
    %v540 = vadd.f32 %v99, %v539
    %v541 = vpop.f32.mrb[0].mxu0
    %542 = vmatprep.mubr.f32.mxu0 0.0
    %543 = vmatmul.mubr.f32.gmra.mrb[0].mxu0 %v213
    %v544 = vpop.f32.mrb[0].mxu0
    %v545 = vadd.f32 %v99, %v544
    %v546 = vpop.f32.mrb[0].mxu0
    %547 = vmatprep.mubr.f32.mxu0 0.0
    %548 = vmatmul.mubr.f32.gmra.mrb[0].mxu0 %v216
    %v549 = vpop.f32.mrb[0].mxu0
    %v550 = vadd.f32 %v99, %v549
    %v551 = vpop.f32.mrb[0].mxu0
    %552 = vmatprep.mubr.f32.mxu0 0.0
    %553 = vmatmul.mubr.f32.gmra.mrb[0].mxu0 %v219
    %v554 = vpop.f32.mrb[0].mxu0
    %v555 = vadd.f32 %v99, %v554
    %v556 = vpop.f32.mrb[0].mxu0
    %557 = vmatprep.mubr.f32.mxu0 0.0
    %558 = vmatmul.mubr.f32.gmra.mrb[0].mxu0 %v222
    %v559 = vpop.f32.mrb[0].mxu0
    %v560 = vadd.f32 %v99, %v559
    %v561 = vpop.f32.mrb[0].mxu0
    %562 = vmatprep.mubr.f32.mxu0 0.0
    %563 = vmatmul.mubr.f32.gmra.mrb[0].mxu0 %v225
    %v564 = vpop.f32.mrb[0].mxu0
    %v565 = vadd.f32 %v99, %v564
    %v566 = vpop.f32.mrb[0].mxu0
    %567 = vmatprep.mubr.f32.mxu0 0.0
    %568 = vmatmul.mubr.f32.gmra.mrb[0].mxu0 %v228
    %v569 = vpop.f32.mrb[0].mxu0
    %v570 = vadd.f32 %v99, %v569
    %v571 = vpop.f32.mrb[0].mxu0
    %572 = vmatprep.mubr.f32.mxu0 0.0
    %573 = vmatmul.mubr.f32.gmra.mrb[0].mxu0 %v231
    %v574 = vpop.f32.mrb[0].mxu0
    %v575 = vadd.f32 %v99, %v574
    %v576 = vpop.f32.mrb[0].mxu0
    %577 = vmatprep.mubr.f32.mxu0 0.0
    %578 = vmatmul.mubr.f32.gmra.mrb[0].mxu0 %v234
    %v579 = vpop.f32.mrb[0].mxu0
    %v580 = vadd.f32 %v99, %v579
    %v581 = vpop.f32.mrb[0].mxu0
    %582 = vmatprep.mubr.f32.mxu0 0.0
    %583 = vmatmul.mubr.f32.gmra.mrb[0].mxu0 %v237
    %v584 = vpop.f32.mrb[0].mxu0
    %v585 = vadd.f32 %v99, %v584
    %v586 = vpop.f32.mrb[0].mxu0
    %587 = vmatprep.mubr.f32.mxu0 0.0
    %588 = vmatmul.mubr.f32.gmra.mrb[0].mxu0 %v240
    %v589 = vpop.f32.mrb[0].mxu0
    %v590 = vadd.f32 %v99, %v589
    %v591 = vpop.f32.mrb[0].mxu0
    %592 = vmatprep.mubr.f32.mxu0 0.0
    %593 = vmatmul.mubr.f32.gmra.mrb[0].mxu0 %v243
    %v594 = vpop.f32.mrb[0].mxu0
    %v595 = vadd.f32 %v99, %v594
    %v596 = vpop.f32.mrb[0].mxu0
    %597 = vmatprep.mubr.f32.mxu0 0.0
    %598 = vmatmul.mubr.f32.gmra.mrb[0].mxu0 %v246
    %v599 = vpop.f32.mrb[0].mxu0
    %v600 = vadd.f32 %v99, %v599
    %v601 = vpop.f32.mrb[0].mxu0
    %602 = vmatprep.mubr.f32.mxu0 0.0
    %603 = vmatmul.mubr.f32.gmra.mrb[0].mxu0 %v249
    %v604 = vpop.f32.mrb[0].mxu0
    %v605 = vadd.f32 %v99, %v604
    %v606 = vpop.f32.mrb[0].mxu0
    %607 = vmatprep.mubr.f32.mxu0 0.0
    %608 = vmatmul.mubr.f32.gmra.mrb[0].mxu0 %v252
    %v609 = vpop.f32.mrb[0].mxu0
    %v610 = vadd.f32 %v99, %v609
    %v611 = vpop.f32.mrb[0].mxu0
    %612 = vmatprep.mubr.f32.mxu0 0.0
    %613 = vmatmul.mubr.f32.gmra.mrb[0].mxu0 %v255
    %v614 = vpop.f32.mrb[0].mxu0
    %v615 = vadd.f32 %v99, %v614
    %v616 = vpop.f32.mrb[0].mxu0
    %617 = vmatprep.mubr.f32.mxu0 0.0
    %618 = vmatmul.mubr.f32.gmra.mrb[0].mxu0 %v258
    %v619 = vpop.f32.mrb[0].mxu0
    %v620 = vadd.f32 %v99, %v619
    %v621 = vpop.f32.mrb[0].mxu0
    %622 = vmatprep.mubr.f32.mxu0 0.0
    %623 = vmatmul.mubr.f32.gmra.mrb[0].mxu0 %v261
    %v624 = vpop.f32.mrb[0].mxu0
    %v625 = vadd.f32 %v99, %v624
    %v626 = vpop.f32.mrb[0].mxu0
    %627 = vmatprep.mubr.f32.mxu0 0.0
    %628 = vmatmul.mubr.f32.gmra.mrb[0].mxu0 %v264
    %v629 = vpop.f32.mrb[0].mxu0
    %v630 = vadd.f32 %v99, %v629
    %v631 = vpop.f32.mrb[0].mxu0
    %632 = vmatprep.mubr.f32.mxu0 0.0
    %633 = vmatmul.mubr.f32.gmra.mrb[0].mxu0 %v267
    %v634 = vpop.f32.mrb[0].mxu0
    %v635 = vadd.f32 %v99, %v634
    %v636 = vpop.f32.mrb[0].mxu0
    %637 = vmatprep.mubr.f32.mxu0 0.0
    %638 = vmatmul.mubr.f32.gmra.mrb[0].mxu0 %v270
    %v639 = vpop.f32.mrb[0].mxu0
    %v640 = vadd.f32 %v99, %v639
    %v641 = vpop.f32.mrb[0].mxu0
    %642 = vmatprep.mubr.f32.mxu0 0.0
    %643 = vmatmul.mubr.f32.gmra.mrb[0].mxu0 %v273
    %v644 = vpop.f32.mrb[0].mxu0
    %v645 = vadd.f32 %v99, %v644
    %v646 = vpop.f32.mrb[0].mxu0
    %647 = vmatprep.mubr.f32.mxu0 0.0
    %648 = vmatmul.mubr.f32.gmra.mrb[0].mxu0 %v276
    %v649 = vpop.f32.mrb[0].mxu0
    %v650 = vadd.f32 %v99, %v649
    %v651 = vpop.f32.mrb[0].mxu0
    %652 = vmatprep.mubr.f32.mxu0 0.0
    %653 = vmatmul.mubr.f32.gmra.mrb[0].mxu0 %v279
    %v654 = vpop.f32.mrb[0].mxu0
    %v655 = vadd.f32 %v99, %v654
    %v656 = vpop.f32.mrb[0].mxu0
    %657 = vmatprep.mubr.f32.mxu0 0.0
    %658 = vmatmul.mubr.f32.gmra.mrb[0].mxu0 %v282
    %v659 = vpop.f32.mrb[0].mxu0
    %v660 = vadd.f32 %v99, %v659
    %v661 = vpop.f32.mrb[0].mxu0
    %662 = vmatprep.mubr.f32.mxu0 0.0
    %663 = vmatmul.mubr.f32.gmra.mrb[0].mxu0 %v285
    %v664 = vpop.f32.mrb[0].mxu0
    %v665 = vadd.f32 %v99, %v664
    %v666 = vpop.f32.mrb[0].mxu0
    %667 = vmatprep.mubr.f32.mxu0 0.0
    %668 = vmatmul.mubr.f32.gmra.mrb[0].mxu0 %v288
    %v669 = vpop.f32.mrb[0].mxu0
    %v670 = vadd.f32 %v99, %v669
    %v671 = vpop.f32.mrb[0].mxu0
    %672 = vmatprep.mubr.f32.mxu0 0.0
    %673 = vmatmul.mubr.f32.gmra.mrb[0].mxu0 %v291
    %v674 = vpop.f32.mrb[0].mxu0
    %v675 = vadd.f32 %v99, %v674
    %v676 = vpop.f32.mrb[0].mxu0
    %677 = vdwg.mxu0
    %vm678 = vcmask 64512
    %v679 = vsel %vm678, %v360, 0.0
    %680 = vadd.xlane.f32.xlu0 %v679
    %v681 = vpop.xlane.xlu0 %680
    %v682 = vsel %vm678, %v365, 0.0
    %683 = vadd.xlane.f32.xlu0 %v682
    %v684 = vpop.xlane.xlu0 %683
    %v685 = vsel %vm678, %v370, 0.0
    %686 = vadd.xlane.f32.xlu0 %v685
    %v687 = vpop.xlane.xlu0 %686
    %v688 = vsel %vm678, %v375, 0.0
    %689 = vadd.xlane.f32.xlu0 %v688
    %v690 = vpop.xlane.xlu0 %689
    %v691 = vsel %vm678, %v380, 0.0
    %692 = vadd.xlane.f32.xlu0 %v691
    %v693 = vpop.xlane.xlu0 %692
    %v694 = vsel %vm678, %v385, 0.0
    %695 = vadd.xlane.f32.xlu0 %v694
    %v696 = vpop.xlane.xlu0 %695
    %v697 = vsel %vm678, %v390, 0.0
    %698 = vadd.xlane.f32.xlu0 %v697
    %v699 = vpop.xlane.xlu0 %698
    %v700 = vsel %vm678, %v395, 0.0
    %701 = vadd.xlane.f32.xlu0 %v700
    %v702 = vpop.xlane.xlu0 %701
    %v703 = vsel %vm678, %v400, 0.0
    %704 = vadd.xlane.f32.xlu0 %v703
    %v705 = vpop.xlane.xlu0 %704
    %v706 = vsel %vm678, %v405, 0.0
    %707 = vadd.xlane.f32.xlu0 %v706
    %v708 = vpop.xlane.xlu0 %707
    %v709 = vsel %vm678, %v410, 0.0
    %710 = vadd.xlane.f32.xlu0 %v709
    %v711 = vpop.xlane.xlu0 %710
    %v712 = vsel %vm678, %v415, 0.0
    %713 = vadd.xlane.f32.xlu0 %v712
    %v714 = vpop.xlane.xlu0 %713
    %v715 = vsel %vm678, %v420, 0.0
    %716 = vadd.xlane.f32.xlu0 %v715
    %v717 = vpop.xlane.xlu0 %716
    %v718 = vsel %vm678, %v425, 0.0
    %719 = vadd.xlane.f32.xlu0 %v718
    %v720 = vpop.xlane.xlu0 %719
    %v721 = vsel %vm678, %v430, 0.0
    %722 = vadd.xlane.f32.xlu0 %v721
    %v723 = vpop.xlane.xlu0 %722
    %v724 = vsel %vm678, %v435, 0.0
    %725 = vadd.xlane.f32.xlu0 %v724
    %v726 = vpop.xlane.xlu0 %725
    %v727 = vsel %vm678, %v440, 0.0
    %728 = vadd.xlane.f32.xlu0 %v727
    %v729 = vpop.xlane.xlu0 %728
    %v730 = vsel %vm678, %v445, 0.0
    %731 = vadd.xlane.f32.xlu0 %v730
    %v732 = vpop.xlane.xlu0 %731
    %v733 = vsel %vm678, %v450, 0.0
    %734 = vadd.xlane.f32.xlu0 %v733
    %v735 = vpop.xlane.xlu0 %734
    %v736 = vsel %vm678, %v455, 0.0
    %737 = vadd.xlane.f32.xlu0 %v736
    %v738 = vpop.xlane.xlu0 %737
    %v739 = vsel %vm678, %v460, 0.0
    %740 = vadd.xlane.f32.xlu0 %v739
    %v741 = vpop.xlane.xlu0 %740
    %v742 = vsel %vm678, %v465, 0.0
    %743 = vadd.xlane.f32.xlu0 %v742
    %v744 = vpop.xlane.xlu0 %743
    %v745 = vsel %vm678, %v470, 0.0
    %746 = vadd.xlane.f32.xlu0 %v745
    %v747 = vpop.xlane.xlu0 %746
    %v748 = vsel %vm678, %v475, 0.0
    %749 = vadd.xlane.f32.xlu0 %v748
    %v750 = vpop.xlane.xlu0 %749
    %v751 = vsel %vm678, %v480, 0.0
    %752 = vadd.xlane.f32.xlu0 %v751
    %v753 = vpop.xlane.xlu0 %752
    %v754 = vsel %vm678, %v485, 0.0
    %755 = vadd.xlane.f32.xlu0 %v754
    %v756 = vpop.xlane.xlu0 %755
    %v757 = vsel %vm678, %v490, 0.0
    %758 = vadd.xlane.f32.xlu0 %v757
    %v759 = vpop.xlane.xlu0 %758
    %v760 = vsel %vm678, %v495, 0.0
    %761 = vadd.xlane.f32.xlu0 %v760
    %v762 = vpop.xlane.xlu0 %761
    %v763 = vsel %vm678, %v500, 0.0
    %764 = vadd.xlane.f32.xlu0 %v763
    %v765 = vpop.xlane.xlu0 %764
    %v766 = vsel %vm678, %v505, 0.0
    %767 = vadd.xlane.f32.xlu0 %v766
    %v768 = vpop.xlane.xlu0 %767
    %v769 = vsel %vm678, %v510, 0.0
    %770 = vadd.xlane.f32.xlu0 %v769
    %v771 = vpop.xlane.xlu0 %770
    %v772 = vsel %vm678, %v515, 0.0
    %773 = vadd.xlane.f32.xlu0 %v772
    %v774 = vpop.xlane.xlu0 %773
    %v775 = vsel %vm678, %v520, 0.0
    %776 = vadd.xlane.f32.xlu0 %v775
    %v777 = vpop.xlane.xlu0 %776
    %v778 = vsel %vm678, %v525, 0.0
    %779 = vadd.xlane.f32.xlu0 %v778
    %v780 = vpop.xlane.xlu0 %779
    %v781 = vsel %vm678, %v530, 0.0
    %782 = vadd.xlane.f32.xlu0 %v781
    %v783 = vpop.xlane.xlu0 %782
    %v784 = vsel %vm678, %v535, 0.0
    %785 = vadd.xlane.f32.xlu0 %v784
    %v786 = vpop.xlane.xlu0 %785
    %v787 = vsel %vm678, %v540, 0.0
    %788 = vadd.xlane.f32.xlu0 %v787
    %v789 = vpop.xlane.xlu0 %788
    %v790 = vsel %vm678, %v545, 0.0
    %791 = vadd.xlane.f32.xlu0 %v790
    %v792 = vpop.xlane.xlu0 %791
    %v793 = vsel %vm678, %v550, 0.0
    %794 = vadd.xlane.f32.xlu0 %v793
    %v795 = vpop.xlane.xlu0 %794
    %v796 = vsel %vm678, %v555, 0.0
    %797 = vadd.xlane.f32.xlu0 %v796
    %v798 = vpop.xlane.xlu0 %797
    %v799 = vsel %vm678, %v560, 0.0
    %800 = vadd.xlane.f32.xlu0 %v799
    %v801 = vpop.xlane.xlu0 %800
    %v802 = vsel %vm678, %v565, 0.0
    %803 = vadd.xlane.f32.xlu0 %v802
    %v804 = vpop.xlane.xlu0 %803
    %v805 = vsel %vm678, %v570, 0.0
    %806 = vadd.xlane.f32.xlu0 %v805
    %v807 = vpop.xlane.xlu0 %806
    %v808 = vsel %vm678, %v575, 0.0
    %809 = vadd.xlane.f32.xlu0 %v808
    %v810 = vpop.xlane.xlu0 %809
    %v811 = vsel %vm678, %v580, 0.0
    %812 = vadd.xlane.f32.xlu0 %v811
    %v813 = vpop.xlane.xlu0 %812
    %v814 = vsel %vm678, %v585, 0.0
    %815 = vadd.xlane.f32.xlu0 %v814
    %v816 = vpop.xlane.xlu0 %815
    %v817 = vsel %vm678, %v590, 0.0
    %818 = vadd.xlane.f32.xlu0 %v817
    %v819 = vpop.xlane.xlu0 %818
    %v820 = vsel %vm678, %v595, 0.0
    %821 = vadd.xlane.f32.xlu0 %v820
    %v822 = vpop.xlane.xlu0 %821
    %v823 = vsel %vm678, %v600, 0.0
    %824 = vadd.xlane.f32.xlu0 %v823
    %v825 = vpop.xlane.xlu0 %824
    %v826 = vsel %vm678, %v605, 0.0
    %827 = vadd.xlane.f32.xlu0 %v826
    %v828 = vpop.xlane.xlu0 %827
    %v829 = vsel %vm678, %v610, 0.0
    %830 = vadd.xlane.f32.xlu0 %v829
    %v831 = vpop.xlane.xlu0 %830
    %v832 = vsel %vm678, %v615, 0.0
    %833 = vadd.xlane.f32.xlu0 %v832
    %v834 = vpop.xlane.xlu0 %833
    %v835 = vsel %vm678, %v620, 0.0
    %836 = vadd.xlane.f32.xlu0 %v835
    %v837 = vpop.xlane.xlu0 %836
    %v838 = vsel %vm678, %v625, 0.0
    %839 = vadd.xlane.f32.xlu0 %v838
    %v840 = vpop.xlane.xlu0 %839
    %v841 = vsel %vm678, %v630, 0.0
    %842 = vadd.xlane.f32.xlu0 %v841
    %v843 = vpop.xlane.xlu0 %842
    %v844 = vsel %vm678, %v635, 0.0
    %845 = vadd.xlane.f32.xlu0 %v844
    %v846 = vpop.xlane.xlu0 %845
    %v847 = vsel %vm678, %v640, 0.0
    %848 = vadd.xlane.f32.xlu0 %v847
    %v849 = vpop.xlane.xlu0 %848
    %v850 = vsel %vm678, %v645, 0.0
    %851 = vadd.xlane.f32.xlu0 %v850
    %v852 = vpop.xlane.xlu0 %851
    %v853 = vsel %vm678, %v650, 0.0
    %854 = vadd.xlane.f32.xlu0 %v853
    %v855 = vpop.xlane.xlu0 %854
    %v856 = vsel %vm678, %v655, 0.0
    %857 = vadd.xlane.f32.xlu0 %v856
    %v858 = vpop.xlane.xlu0 %857
    %v859 = vsel %vm678, %v660, 0.0
    %860 = vadd.xlane.f32.xlu0 %v859
    %v861 = vpop.xlane.xlu0 %860
    %v862 = vsel %vm678, %v665, 0.0
    %863 = vadd.xlane.f32.xlu0 %v862
    %v864 = vpop.xlane.xlu0 %863
    %v865 = vsel %vm678, %v670, 0.0
    %866 = vadd.xlane.f32.xlu0 %v865
    %v867 = vpop.xlane.xlu0 %866
    %v868 = vsel %vm678, %v675, 0.0
    %869 = vadd.xlane.f32.xlu0 %v868
    %v870 = vpop.xlane.xlu0 %869
    %v871 = vrcp.pop 8.0
    %v872 = vmul.f32 %v681, %v871
    %v873 = vmul.f32 %v684, %v871
    %v874 = vmul.f32 %v687, %v871
    %v875 = vmul.f32 %v690, %v871
    %v876 = vmul.f32 %v693, %v871
    %v877 = vmul.f32 %v696, %v871
    %v878 = vmul.f32 %v699, %v871
    %v879 = vmul.f32 %v702, %v871
    %v880 = vmul.f32 %v705, %v871
    %v881 = vmul.f32 %v708, %v871
    %v882 = vmul.f32 %v711, %v871
    %v883 = vmul.f32 %v714, %v871
    %v884 = vmul.f32 %v717, %v871
    %v885 = vmul.f32 %v720, %v871
    %v886 = vmul.f32 %v723, %v871
    %v887 = vmul.f32 %v726, %v871
    %v888 = vmul.f32 %v729, %v871
    %v889 = vmul.f32 %v732, %v871
    %v890 = vmul.f32 %v735, %v871
    %v891 = vmul.f32 %v738, %v871
    %v892 = vmul.f32 %v741, %v871
    %v893 = vmul.f32 %v744, %v871
    %v894 = vmul.f32 %v747, %v871
    %v895 = vmul.f32 %v750, %v871
    %v896 = vmul.f32 %v753, %v871
    %v897 = vmul.f32 %v756, %v871
    %v898 = vmul.f32 %v759, %v871
    %v899 = vmul.f32 %v762, %v871
    %v900 = vmul.f32 %v765, %v871
    %v901 = vmul.f32 %v768, %v871
    %v902 = vmul.f32 %v771, %v871
    %v903 = vmul.f32 %v774, %v871
    %v904 = vmul.f32 %v777, %v871
    %v905 = vmul.f32 %v780, %v871
    %v906 = vmul.f32 %v783, %v871
    %v907 = vmul.f32 %v786, %v871
    %v908 = vmul.f32 %v789, %v871
    %v909 = vmul.f32 %v792, %v871
    %v910 = vmul.f32 %v795, %v871
    %v911 = vmul.f32 %v798, %v871
    %v912 = vmul.f32 %v801, %v871
    %v913 = vmul.f32 %v804, %v871
    %v914 = vmul.f32 %v807, %v871
    %v915 = vmul.f32 %v810, %v871
    %v916 = vmul.f32 %v813, %v871
    %v917 = vmul.f32 %v816, %v871
    %v918 = vmul.f32 %v819, %v871
    %v919 = vmul.f32 %v822, %v871
    %v920 = vmul.f32 %v825, %v871
    %v921 = vmul.f32 %v828, %v871
    %v922 = vmul.f32 %v831, %v871
    %v923 = vmul.f32 %v834, %v871
    %v924 = vmul.f32 %v837, %v871
    %v925 = vmul.f32 %v840, %v871
    %v926 = vmul.f32 %v843, %v871
    %v927 = vmul.f32 %v846, %v871
    %v928 = vmul.f32 %v849, %v871
    %v929 = vmul.f32 %v852, %v871
    %v930 = vmul.f32 %v855, %v871
    %v931 = vmul.f32 %v858, %v871
    %v932 = vmul.f32 %v861, %v871
    %v933 = vmul.f32 %v864, %v871
    %v934 = vmul.f32 %v867, %v871
    %v935 = vmul.f32 %v870, %v871
    %v936 = vsub.f32 %v360, %v872
    %v937 = vsub.f32 %v365, %v873
    %v938 = vsub.f32 %v370, %v874
    %v939 = vsub.f32 %v375, %v875
    %v940 = vsub.f32 %v380, %v876
    %v941 = vsub.f32 %v385, %v877
    %v942 = vsub.f32 %v390, %v878
    %v943 = vsub.f32 %v395, %v879
    %v944 = vsub.f32 %v400, %v880
    %v945 = vsub.f32 %v405, %v881
    %v946 = vsub.f32 %v410, %v882
    %v947 = vsub.f32 %v415, %v883
    %v948 = vsub.f32 %v420, %v884
    %v949 = vsub.f32 %v425, %v885
    %v950 = vsub.f32 %v430, %v886
    %v951 = vsub.f32 %v435, %v887
    %v952 = vsub.f32 %v440, %v888
    %v953 = vsub.f32 %v445, %v889
    %v954 = vsub.f32 %v450, %v890
    %v955 = vsub.f32 %v455, %v891
    %v956 = vsub.f32 %v460, %v892
    %v957 = vsub.f32 %v465, %v893
    %v958 = vsub.f32 %v470, %v894
    %v959 = vsub.f32 %v475, %v895
    %v960 = vsub.f32 %v480, %v896
    %v961 = vsub.f32 %v485, %v897
    %v962 = vsub.f32 %v490, %v898
    %v963 = vsub.f32 %v495, %v899
    %v964 = vsub.f32 %v500, %v900
    %v965 = vsub.f32 %v505, %v901
    %v966 = vsub.f32 %v510, %v902
    %v967 = vsub.f32 %v515, %v903
    %v968 = vsub.f32 %v520, %v904
    %v969 = vsub.f32 %v525, %v905
    %v970 = vsub.f32 %v530, %v906
    %v971 = vsub.f32 %v535, %v907
    %v972 = vsub.f32 %v540, %v908
    %v973 = vsub.f32 %v545, %v909
    %v974 = vsub.f32 %v550, %v910
    %v975 = vsub.f32 %v555, %v911
    %v976 = vsub.f32 %v560, %v912
    %v977 = vsub.f32 %v565, %v913
    %v978 = vsub.f32 %v570, %v914
    %v979 = vsub.f32 %v575, %v915
    %v980 = vsub.f32 %v580, %v916
    %v981 = vsub.f32 %v585, %v917
    %v982 = vsub.f32 %v590, %v918
    %v983 = vsub.f32 %v595, %v919
    %v984 = vsub.f32 %v600, %v920
    %v985 = vsub.f32 %v605, %v921
    %v986 = vsub.f32 %v610, %v922
    %v987 = vsub.f32 %v615, %v923
    %v988 = vsub.f32 %v620, %v924
    %v989 = vsub.f32 %v625, %v925
    %v990 = vsub.f32 %v630, %v926
    %v991 = vsub.f32 %v635, %v927
    %v992 = vsub.f32 %v640, %v928
    %v993 = vsub.f32 %v645, %v929
    %v994 = vsub.f32 %v650, %v930
    %v995 = vsub.f32 %v655, %v931
    %v996 = vsub.f32 %v660, %v932
    %v997 = vsub.f32 %v665, %v933
    %v998 = vsub.f32 %v670, %v934
    %v999 = vsub.f32 %v675, %v935
    %v1000 = vmul.f32 %v936, %v936
    %v1001 = vmul.f32 %v937, %v937
    %v1002 = vmul.f32 %v938, %v938
    %v1003 = vmul.f32 %v939, %v939
    %v1004 = vmul.f32 %v940, %v940
    %v1005 = vmul.f32 %v941, %v941
    %v1006 = vmul.f32 %v942, %v942
    %v1007 = vmul.f32 %v943, %v943
    %v1008 = vmul.f32 %v944, %v944
    %v1009 = vmul.f32 %v945, %v945
    %v1010 = vmul.f32 %v946, %v946
    %v1011 = vmul.f32 %v947, %v947
    %v1012 = vmul.f32 %v948, %v948
    %v1013 = vmul.f32 %v949, %v949
    %v1014 = vmul.f32 %v950, %v950
    %v1015 = vmul.f32 %v951, %v951
    %v1016 = vmul.f32 %v952, %v952
    %v1017 = vmul.f32 %v953, %v953
    %v1018 = vmul.f32 %v954, %v954
    %v1019 = vmul.f32 %v955, %v955
    %v1020 = vmul.f32 %v956, %v956
    %v1021 = vmul.f32 %v957, %v957
    %v1022 = vmul.f32 %v958, %v958
    %v1023 = vmul.f32 %v959, %v959
    %v1024 = vmul.f32 %v960, %v960
    %v1025 = vmul.f32 %v961, %v961
    %v1026 = vmul.f32 %v962, %v962
    %v1027 = vmul.f32 %v963, %v963
    %v1028 = vmul.f32 %v964, %v964
    %v1029 = vmul.f32 %v965, %v965
    %v1030 = vmul.f32 %v966, %v966
    %v1031 = vmul.f32 %v967, %v967
    %v1032 = vmul.f32 %v968, %v968
    %v1033 = vmul.f32 %v969, %v969
    %v1034 = vmul.f32 %v970, %v970
    %v1035 = vmul.f32 %v971, %v971
    %v1036 = vmul.f32 %v972, %v972
    %v1037 = vmul.f32 %v973, %v973
    %v1038 = vmul.f32 %v974, %v974
    %v1039 = vmul.f32 %v975, %v975
    %v1040 = vmul.f32 %v976, %v976
    %v1041 = vmul.f32 %v977, %v977
    %v1042 = vmul.f32 %v978, %v978
    %v1043 = vmul.f32 %v979, %v979
    %v1044 = vmul.f32 %v980, %v980
    %v1045 = vmul.f32 %v981, %v981
    %v1046 = vmul.f32 %v982, %v982
    %v1047 = vmul.f32 %v983, %v983
    %v1048 = vmul.f32 %v984, %v984
    %v1049 = vmul.f32 %v985, %v985
    %v1050 = vmul.f32 %v986, %v986
    %v1051 = vmul.f32 %v987, %v987
    %v1052 = vmul.f32 %v988, %v988
    %v1053 = vmul.f32 %v989, %v989
    %v1054 = vmul.f32 %v990, %v990
    %v1055 = vmul.f32 %v991, %v991
    %v1056 = vmul.f32 %v992, %v992
    %v1057 = vmul.f32 %v993, %v993
    %v1058 = vmul.f32 %v994, %v994
    %v1059 = vmul.f32 %v995, %v995
    %v1060 = vmul.f32 %v996, %v996
    %v1061 = vmul.f32 %v997, %v997
    %v1062 = vmul.f32 %v998, %v998
    %v1063 = vmul.f32 %v999, %v999
    %v1064 = vsel %vm678, %v1000, 0.0
    %1065 = vadd.xlane.f32.xlu0 %v1064
    %v1066 = vpop.xlane.xlu0 %1065
    %v1067 = vsel %vm678, %v1001, 0.0
    %1068 = vadd.xlane.f32.xlu0 %v1067
    %v1069 = vpop.xlane.xlu0 %1068
    %v1070 = vsel %vm678, %v1002, 0.0
    %1071 = vadd.xlane.f32.xlu0 %v1070
    %v1072 = vpop.xlane.xlu0 %1071
    %v1073 = vsel %vm678, %v1003, 0.0
    %1074 = vadd.xlane.f32.xlu0 %v1073
    %v1075 = vpop.xlane.xlu0 %1074
    %v1076 = vsel %vm678, %v1004, 0.0
    %1077 = vadd.xlane.f32.xlu0 %v1076
    %v1078 = vpop.xlane.xlu0 %1077
    %v1079 = vsel %vm678, %v1005, 0.0
    %1080 = vadd.xlane.f32.xlu0 %v1079
    %v1081 = vpop.xlane.xlu0 %1080
    %v1082 = vsel %vm678, %v1006, 0.0
    %1083 = vadd.xlane.f32.xlu0 %v1082
    %v1084 = vpop.xlane.xlu0 %1083
    %v1085 = vsel %vm678, %v1007, 0.0
    %1086 = vadd.xlane.f32.xlu0 %v1085
    %v1087 = vpop.xlane.xlu0 %1086
    %v1088 = vsel %vm678, %v1008, 0.0
    %1089 = vadd.xlane.f32.xlu0 %v1088
    %v1090 = vpop.xlane.xlu0 %1089
    %v1091 = vsel %vm678, %v1009, 0.0
    %1092 = vadd.xlane.f32.xlu0 %v1091
    %v1093 = vpop.xlane.xlu0 %1092
    %v1094 = vsel %vm678, %v1010, 0.0
    %1095 = vadd.xlane.f32.xlu0 %v1094
    %v1096 = vpop.xlane.xlu0 %1095
    %v1097 = vsel %vm678, %v1011, 0.0
    %1098 = vadd.xlane.f32.xlu0 %v1097
    %v1099 = vpop.xlane.xlu0 %1098
    %v1100 = vsel %vm678, %v1012, 0.0
    %1101 = vadd.xlane.f32.xlu0 %v1100
    %v1102 = vpop.xlane.xlu0 %1101
    %v1103 = vsel %vm678, %v1013, 0.0
    %1104 = vadd.xlane.f32.xlu0 %v1103
    %v1105 = vpop.xlane.xlu0 %1104
    %v1106 = vsel %vm678, %v1014, 0.0
    %1107 = vadd.xlane.f32.xlu0 %v1106
    %v1108 = vpop.xlane.xlu0 %1107
    %v1109 = vsel %vm678, %v1015, 0.0
    %1110 = vadd.xlane.f32.xlu0 %v1109
    %v1111 = vpop.xlane.xlu0 %1110
    %v1112 = vsel %vm678, %v1016, 0.0
    %1113 = vadd.xlane.f32.xlu0 %v1112
    %v1114 = vpop.xlane.xlu0 %1113
    %v1115 = vsel %vm678, %v1017, 0.0
    %1116 = vadd.xlane.f32.xlu0 %v1115
    %v1117 = vpop.xlane.xlu0 %1116
    %v1118 = vsel %vm678, %v1018, 0.0
    %1119 = vadd.xlane.f32.xlu0 %v1118
    %v1120 = vpop.xlane.xlu0 %1119
    %v1121 = vsel %vm678, %v1019, 0.0
    %1122 = vadd.xlane.f32.xlu0 %v1121
    %v1123 = vpop.xlane.xlu0 %1122
    %v1124 = vsel %vm678, %v1020, 0.0
    %1125 = vadd.xlane.f32.xlu0 %v1124
    %v1126 = vpop.xlane.xlu0 %1125
    %v1127 = vsel %vm678, %v1021, 0.0
    %1128 = vadd.xlane.f32.xlu0 %v1127
    %v1129 = vpop.xlane.xlu0 %1128
    %v1130 = vsel %vm678, %v1022, 0.0
    %1131 = vadd.xlane.f32.xlu0 %v1130
    %v1132 = vpop.xlane.xlu0 %1131
    %v1133 = vsel %vm678, %v1023, 0.0
    %1134 = vadd.xlane.f32.xlu0 %v1133
    %v1135 = vpop.xlane.xlu0 %1134
    %v1136 = vsel %vm678, %v1024, 0.0
    %1137 = vadd.xlane.f32.xlu0 %v1136
    %v1138 = vpop.xlane.xlu0 %1137
    %v1139 = vsel %vm678, %v1025, 0.0
    %1140 = vadd.xlane.f32.xlu0 %v1139
    %v1141 = vpop.xlane.xlu0 %1140
    %v1142 = vsel %vm678, %v1026, 0.0
    %1143 = vadd.xlane.f32.xlu0 %v1142
    %v1144 = vpop.xlane.xlu0 %1143
    %v1145 = vsel %vm678, %v1027, 0.0
    %1146 = vadd.xlane.f32.xlu0 %v1145
    %v1147 = vpop.xlane.xlu0 %1146
    %v1148 = vsel %vm678, %v1028, 0.0
    %1149 = vadd.xlane.f32.xlu0 %v1148
    %v1150 = vpop.xlane.xlu0 %1149
    %v1151 = vsel %vm678, %v1029, 0.0
    %1152 = vadd.xlane.f32.xlu0 %v1151
    %v1153 = vpop.xlane.xlu0 %1152
    %v1154 = vsel %vm678, %v1030, 0.0
    %1155 = vadd.xlane.f32.xlu0 %v1154
    %v1156 = vpop.xlane.xlu0 %1155
    %v1157 = vsel %vm678, %v1031, 0.0
    %1158 = vadd.xlane.f32.xlu0 %v1157
    %v1159 = vpop.xlane.xlu0 %1158
    %v1160 = vsel %vm678, %v1032, 0.0
    %1161 = vadd.xlane.f32.xlu0 %v1160
    %v1162 = vpop.xlane.xlu0 %1161
    %v1163 = vsel %vm678, %v1033, 0.0
    %1164 = vadd.xlane.f32.xlu0 %v1163
    %v1165 = vpop.xlane.xlu0 %1164
    %v1166 = vsel %vm678, %v1034, 0.0
    %1167 = vadd.xlane.f32.xlu0 %v1166
    %v1168 = vpop.xlane.xlu0 %1167
    %v1169 = vsel %vm678, %v1035, 0.0
    %1170 = vadd.xlane.f32.xlu0 %v1169
    %v1171 = vpop.xlane.xlu0 %1170
    %v1172 = vsel %vm678, %v1036, 0.0
    %1173 = vadd.xlane.f32.xlu0 %v1172
    %v1174 = vpop.xlane.xlu0 %1173
    %v1175 = vsel %vm678, %v1037, 0.0
    %1176 = vadd.xlane.f32.xlu0 %v1175
    %v1177 = vpop.xlane.xlu0 %1176
    %v1178 = vsel %vm678, %v1038, 0.0
    %1179 = vadd.xlane.f32.xlu0 %v1178
    %v1180 = vpop.xlane.xlu0 %1179
    %v1181 = vsel %vm678, %v1039, 0.0
    %1182 = vadd.xlane.f32.xlu0 %v1181
    %v1183 = vpop.xlane.xlu0 %1182
    %v1184 = vsel %vm678, %v1040, 0.0
    %1185 = vadd.xlane.f32.xlu0 %v1184
    %v1186 = vpop.xlane.xlu0 %1185
    %v1187 = vsel %vm678, %v1041, 0.0
    %1188 = vadd.xlane.f32.xlu0 %v1187
    %v1189 = vpop.xlane.xlu0 %1188
    %v1190 = vsel %vm678, %v1042, 0.0
    %1191 = vadd.xlane.f32.xlu0 %v1190
    %v1192 = vpop.xlane.xlu0 %1191
    %v1193 = vsel %vm678, %v1043, 0.0
    %1194 = vadd.xlane.f32.xlu0 %v1193
    %v1195 = vpop.xlane.xlu0 %1194
    %v1196 = vsel %vm678, %v1044, 0.0
    %1197 = vadd.xlane.f32.xlu0 %v1196
    %v1198 = vpop.xlane.xlu0 %1197
    %v1199 = vsel %vm678, %v1045, 0.0
    %1200 = vadd.xlane.f32.xlu0 %v1199
    %v1201 = vpop.xlane.xlu0 %1200
    %v1202 = vsel %vm678, %v1046, 0.0
    %1203 = vadd.xlane.f32.xlu0 %v1202
    %v1204 = vpop.xlane.xlu0 %1203
    %v1205 = vsel %vm678, %v1047, 0.0
    %1206 = vadd.xlane.f32.xlu0 %v1205
    %v1207 = vpop.xlane.xlu0 %1206
    %v1208 = vsel %vm678, %v1048, 0.0
    %1209 = vadd.xlane.f32.xlu0 %v1208
    %v1210 = vpop.xlane.xlu0 %1209
    %v1211 = vsel %vm678, %v1049, 0.0
    %1212 = vadd.xlane.f32.xlu0 %v1211
    %v1213 = vpop.xlane.xlu0 %1212
    %v1214 = vsel %vm678, %v1050, 0.0
    %1215 = vadd.xlane.f32.xlu0 %v1214
    %v1216 = vpop.xlane.xlu0 %1215
    %v1217 = vsel %vm678, %v1051, 0.0
    %1218 = vadd.xlane.f32.xlu0 %v1217
    %v1219 = vpop.xlane.xlu0 %1218
    %v1220 = vsel %vm678, %v1052, 0.0
    %1221 = vadd.xlane.f32.xlu0 %v1220
    %v1222 = vpop.xlane.xlu0 %1221
    %v1223 = vsel %vm678, %v1053, 0.0
    %1224 = vadd.xlane.f32.xlu0 %v1223
    %v1225 = vpop.xlane.xlu0 %1224
    %v1226 = vsel %vm678, %v1054, 0.0
    %1227 = vadd.xlane.f32.xlu0 %v1226
    %v1228 = vpop.xlane.xlu0 %1227
    %v1229 = vsel %vm678, %v1055, 0.0
    %1230 = vadd.xlane.f32.xlu0 %v1229
    %v1231 = vpop.xlane.xlu0 %1230
    %v1232 = vsel %vm678, %v1056, 0.0
    %1233 = vadd.xlane.f32.xlu0 %v1232
    %v1234 = vpop.xlane.xlu0 %1233
    %v1235 = vsel %vm678, %v1057, 0.0
    %1236 = vadd.xlane.f32.xlu0 %v1235
    %v1237 = vpop.xlane.xlu0 %1236
    %v1238 = vsel %vm678, %v1058, 0.0
    %1239 = vadd.xlane.f32.xlu0 %v1238
    %v1240 = vpop.xlane.xlu0 %1239
    %v1241 = vsel %vm678, %v1059, 0.0
    %1242 = vadd.xlane.f32.xlu0 %v1241
    %v1243 = vpop.xlane.xlu0 %1242
    %v1244 = vsel %vm678, %v1060, 0.0
    %1245 = vadd.xlane.f32.xlu0 %v1244
    %v1246 = vpop.xlane.xlu0 %1245
    %v1247 = vsel %vm678, %v1061, 0.0
    %1248 = vadd.xlane.f32.xlu0 %v1247
    %v1249 = vpop.xlane.xlu0 %1248
    %v1250 = vsel %vm678, %v1062, 0.0
    %1251 = vadd.xlane.f32.xlu0 %v1250
    %v1252 = vpop.xlane.xlu0 %1251
    %v1253 = vsel %vm678, %v1063, 0.0
    %1254 = vadd.xlane.f32.xlu0 %v1253
    %v1255 = vpop.xlane.xlu0 %1254
    %v1256 = vmul.f32 %v1066, %v871
    %v1257 = vmul.f32 %v1069, %v871
    %v1258 = vmul.f32 %v1072, %v871
    %v1259 = vmul.f32 %v1075, %v871
    %v1260 = vmul.f32 %v1078, %v871
    %v1261 = vmul.f32 %v1081, %v871
    %v1262 = vmul.f32 %v1084, %v871
    %v1263 = vmul.f32 %v1087, %v871
    %v1264 = vmul.f32 %v1090, %v871
    %v1265 = vmul.f32 %v1093, %v871
    %v1266 = vmul.f32 %v1096, %v871
    %v1267 = vmul.f32 %v1099, %v871
    %v1268 = vmul.f32 %v1102, %v871
    %v1269 = vmul.f32 %v1105, %v871
    %v1270 = vmul.f32 %v1108, %v871
    %v1271 = vmul.f32 %v1111, %v871
    %v1272 = vmul.f32 %v1114, %v871
    %v1273 = vmul.f32 %v1117, %v871
    %v1274 = vmul.f32 %v1120, %v871
    %v1275 = vmul.f32 %v1123, %v871
    %v1276 = vmul.f32 %v1126, %v871
    %v1277 = vmul.f32 %v1129, %v871
    %v1278 = vmul.f32 %v1132, %v871
    %v1279 = vmul.f32 %v1135, %v871
    %v1280 = vmul.f32 %v1138, %v871
    %v1281 = vmul.f32 %v1141, %v871
    %v1282 = vmul.f32 %v1144, %v871
    %v1283 = vmul.f32 %v1147, %v871
    %v1284 = vmul.f32 %v1150, %v871
    %v1285 = vmul.f32 %v1153, %v871
    %v1286 = vmul.f32 %v1156, %v871
    %v1287 = vmul.f32 %v1159, %v871
    %v1288 = vmul.f32 %v1162, %v871
    %v1289 = vmul.f32 %v1165, %v871
    %v1290 = vmul.f32 %v1168, %v871
    %v1291 = vmul.f32 %v1171, %v871
    %v1292 = vmul.f32 %v1174, %v871
    %v1293 = vmul.f32 %v1177, %v871
    %v1294 = vmul.f32 %v1180, %v871
    %v1295 = vmul.f32 %v1183, %v871
    %v1296 = vmul.f32 %v1186, %v871
    %v1297 = vmul.f32 %v1189, %v871
    %v1298 = vmul.f32 %v1192, %v871
    %v1299 = vmul.f32 %v1195, %v871
    %v1300 = vmul.f32 %v1198, %v871
    %v1301 = vmul.f32 %v1201, %v871
    %v1302 = vmul.f32 %v1204, %v871
    %v1303 = vmul.f32 %v1207, %v871
    %v1304 = vmul.f32 %v1210, %v871
    %v1305 = vmul.f32 %v1213, %v871
    %v1306 = vmul.f32 %v1216, %v871
    %v1307 = vmul.f32 %v1219, %v871
    %v1308 = vmul.f32 %v1222, %v871
    %v1309 = vmul.f32 %v1225, %v871
    %v1310 = vmul.f32 %v1228, %v871
    %v1311 = vmul.f32 %v1231, %v871
    %v1312 = vmul.f32 %v1234, %v871
    %v1313 = vmul.f32 %v1237, %v871
    %v1314 = vmul.f32 %v1240, %v871
    %v1315 = vmul.f32 %v1243, %v871
    %v1316 = vmul.f32 %v1246, %v871
    %v1317 = vmul.f32 %v1249, %v871
    %v1318 = vmul.f32 %v1252, %v871
    %v1319 = vmul.f32 %v1255, %v871
    %v1320 = vadd.f32 %v1256, 1e-05
    %v1321 = vadd.f32 %v1257, 1e-05
    %v1322 = vadd.f32 %v1258, 1e-05
    %v1323 = vadd.f32 %v1259, 1e-05
    %v1324 = vadd.f32 %v1260, 1e-05
    %v1325 = vadd.f32 %v1261, 1e-05
    %v1326 = vadd.f32 %v1262, 1e-05
    %v1327 = vadd.f32 %v1263, 1e-05
    %v1328 = vadd.f32 %v1264, 1e-05
    %v1329 = vadd.f32 %v1265, 1e-05
    %v1330 = vadd.f32 %v1266, 1e-05
    %v1331 = vadd.f32 %v1267, 1e-05
    %v1332 = vadd.f32 %v1268, 1e-05
    %v1333 = vadd.f32 %v1269, 1e-05
    %v1334 = vadd.f32 %v1270, 1e-05
    %v1335 = vadd.f32 %v1271, 1e-05
    %v1336 = vadd.f32 %v1272, 1e-05
    %v1337 = vadd.f32 %v1273, 1e-05
    %v1338 = vadd.f32 %v1274, 1e-05
    %v1339 = vadd.f32 %v1275, 1e-05
    %v1340 = vadd.f32 %v1276, 1e-05
    %v1341 = vadd.f32 %v1277, 1e-05
    %v1342 = vadd.f32 %v1278, 1e-05
    %v1343 = vadd.f32 %v1279, 1e-05
    %v1344 = vadd.f32 %v1280, 1e-05
    %v1345 = vadd.f32 %v1281, 1e-05
    %v1346 = vadd.f32 %v1282, 1e-05
    %v1347 = vadd.f32 %v1283, 1e-05
    %v1348 = vadd.f32 %v1284, 1e-05
    %v1349 = vadd.f32 %v1285, 1e-05
    %v1350 = vadd.f32 %v1286, 1e-05
    %v1351 = vadd.f32 %v1287, 1e-05
    %v1352 = vadd.f32 %v1288, 1e-05
    %v1353 = vadd.f32 %v1289, 1e-05
    %v1354 = vadd.f32 %v1290, 1e-05
    %v1355 = vadd.f32 %v1291, 1e-05
    %v1356 = vadd.f32 %v1292, 1e-05
    %v1357 = vadd.f32 %v1293, 1e-05
    %v1358 = vadd.f32 %v1294, 1e-05
    %v1359 = vadd.f32 %v1295, 1e-05
    %v1360 = vadd.f32 %v1296, 1e-05
    %v1361 = vadd.f32 %v1297, 1e-05
    %v1362 = vadd.f32 %v1298, 1e-05
    %v1363 = vadd.f32 %v1299, 1e-05
    %v1364 = vadd.f32 %v1300, 1e-05
    %v1365 = vadd.f32 %v1301, 1e-05
    %v1366 = vadd.f32 %v1302, 1e-05
    %v1367 = vadd.f32 %v1303, 1e-05
    %v1368 = vadd.f32 %v1304, 1e-05
    %v1369 = vadd.f32 %v1305, 1e-05
    %v1370 = vadd.f32 %v1306, 1e-05
    %v1371 = vadd.f32 %v1307, 1e-05
    %v1372 = vadd.f32 %v1308, 1e-05
    %v1373 = vadd.f32 %v1309, 1e-05
    %v1374 = vadd.f32 %v1310, 1e-05
    %v1375 = vadd.f32 %v1311, 1e-05
    %v1376 = vadd.f32 %v1312, 1e-05
    %v1377 = vadd.f32 %v1313, 1e-05
    %v1378 = vadd.f32 %v1314, 1e-05
    %v1379 = vadd.f32 %v1315, 1e-05
    %v1380 = vadd.f32 %v1316, 1e-05
    %v1381 = vadd.f32 %v1317, 1e-05
    %v1382 = vadd.f32 %v1318, 1e-05
    %v1383 = vadd.f32 %v1319, 1e-05
    %v1384 = vrsqrt.pop %v1320
    %v1385 = vrsqrt.pop %v1321
    %v1386 = vrsqrt.pop %v1322
    %v1387 = vrsqrt.pop %v1323
    %v1388 = vrsqrt.pop %v1324
    %v1389 = vrsqrt.pop %v1325
    %v1390 = vrsqrt.pop %v1326
    %v1391 = vrsqrt.pop %v1327
    %v1392 = vrsqrt.pop %v1328
    %v1393 = vrsqrt.pop %v1329
    %v1394 = vrsqrt.pop %v1330
    %v1395 = vrsqrt.pop %v1331
    %v1396 = vrsqrt.pop %v1332
    %v1397 = vrsqrt.pop %v1333
    %v1398 = vrsqrt.pop %v1334
    %v1399 = vrsqrt.pop %v1335
    %v1400 = vrsqrt.pop %v1336
    %v1401 = vrsqrt.pop %v1337
    %v1402 = vrsqrt.pop %v1338
    %v1403 = vrsqrt.pop %v1339
    %v1404 = vrsqrt.pop %v1340
    %v1405 = vrsqrt.pop %v1341
    %v1406 = vrsqrt.pop %v1342
    %v1407 = vrsqrt.pop %v1343
    %v1408 = vrsqrt.pop %v1344
    %v1409 = vrsqrt.pop %v1345
    %v1410 = vrsqrt.pop %v1346
    %v1411 = vrsqrt.pop %v1347
    %v1412 = vrsqrt.pop %v1348
    %v1413 = vrsqrt.pop %v1349
    %v1414 = vrsqrt.pop %v1350
    %v1415 = vrsqrt.pop %v1351
    %v1416 = vrsqrt.pop %v1352
    %v1417 = vrsqrt.pop %v1353
    %v1418 = vrsqrt.pop %v1354
    %v1419 = vrsqrt.pop %v1355
    %v1420 = vrsqrt.pop %v1356
    %v1421 = vrsqrt.pop %v1357
    %v1422 = vrsqrt.pop %v1358
    %v1423 = vrsqrt.pop %v1359
    %v1424 = vrsqrt.pop %v1360
    %v1425 = vrsqrt.pop %v1361
    %v1426 = vrsqrt.pop %v1362
    %v1427 = vrsqrt.pop %v1363
    %v1428 = vrsqrt.pop %v1364
    %v1429 = vrsqrt.pop %v1365
    %v1430 = vrsqrt.pop %v1366
    %v1431 = vrsqrt.pop %v1367
    %v1432 = vrsqrt.pop %v1368
    %v1433 = vrsqrt.pop %v1369
    %v1434 = vrsqrt.pop %v1370
    %v1435 = vrsqrt.pop %v1371
    %v1436 = vrsqrt.pop %v1372
    %v1437 = vrsqrt.pop %v1373
    %v1438 = vrsqrt.pop %v1374
    %v1439 = vrsqrt.pop %v1375
    %v1440 = vrsqrt.pop %v1376
    %v1441 = vrsqrt.pop %v1377
    %v1442 = vrsqrt.pop %v1378
    %v1443 = vrsqrt.pop %v1379
    %v1444 = vrsqrt.pop %v1380
    %v1445 = vrsqrt.pop %v1381
    %v1446 = vrsqrt.pop %v1382
    %v1447 = vrsqrt.pop %v1383
    %v1448 = vmul.f32 %v936, %v1384
    %v1449 = vmul.f32 %v937, %v1385
    %v1450 = vmul.f32 %v938, %v1386
    %v1451 = vmul.f32 %v939, %v1387
    %v1452 = vmul.f32 %v940, %v1388
    %v1453 = vmul.f32 %v941, %v1389
    %v1454 = vmul.f32 %v942, %v1390
    %v1455 = vmul.f32 %v943, %v1391
    %v1456 = vmul.f32 %v944, %v1392
    %v1457 = vmul.f32 %v945, %v1393
    %v1458 = vmul.f32 %v946, %v1394
    %v1459 = vmul.f32 %v947, %v1395
    %v1460 = vmul.f32 %v948, %v1396
    %v1461 = vmul.f32 %v949, %v1397
    %v1462 = vmul.f32 %v950, %v1398
    %v1463 = vmul.f32 %v951, %v1399
    %v1464 = vmul.f32 %v952, %v1400
    %v1465 = vmul.f32 %v953, %v1401
    %v1466 = vmul.f32 %v954, %v1402
    %v1467 = vmul.f32 %v955, %v1403
    %v1468 = vmul.f32 %v956, %v1404
    %v1469 = vmul.f32 %v957, %v1405
    %v1470 = vmul.f32 %v958, %v1406
    %v1471 = vmul.f32 %v959, %v1407
    %v1472 = vmul.f32 %v960, %v1408
    %v1473 = vmul.f32 %v961, %v1409
    %v1474 = vmul.f32 %v962, %v1410
    %v1475 = vmul.f32 %v963, %v1411
    %v1476 = vmul.f32 %v964, %v1412
    %v1477 = vmul.f32 %v965, %v1413
    %v1478 = vmul.f32 %v966, %v1414
    %v1479 = vmul.f32 %v967, %v1415
    %v1480 = vmul.f32 %v968, %v1416
    %v1481 = vmul.f32 %v969, %v1417
    %v1482 = vmul.f32 %v970, %v1418
    %v1483 = vmul.f32 %v971, %v1419
    %v1484 = vmul.f32 %v972, %v1420
    %v1485 = vmul.f32 %v973, %v1421
    %v1486 = vmul.f32 %v974, %v1422
    %v1487 = vmul.f32 %v975, %v1423
    %v1488 = vmul.f32 %v976, %v1424
    %v1489 = vmul.f32 %v977, %v1425
    %v1490 = vmul.f32 %v978, %v1426
    %v1491 = vmul.f32 %v979, %v1427
    %v1492 = vmul.f32 %v980, %v1428
    %v1493 = vmul.f32 %v981, %v1429
    %v1494 = vmul.f32 %v982, %v1430
    %v1495 = vmul.f32 %v983, %v1431
    %v1496 = vmul.f32 %v984, %v1432
    %v1497 = vmul.f32 %v985, %v1433
    %v1498 = vmul.f32 %v986, %v1434
    %v1499 = vmul.f32 %v987, %v1435
    %v1500 = vmul.f32 %v988, %v1436
    %v1501 = vmul.f32 %v989, %v1437
    %v1502 = vmul.f32 %v990, %v1438
    %v1503 = vmul.f32 %v991, %v1439
    %v1504 = vmul.f32 %v992, %v1440
    %v1505 = vmul.f32 %v993, %v1441
    %v1506 = vmul.f32 %v994, %v1442
    %v1507 = vmul.f32 %v995, %v1443
    %v1508 = vmul.f32 %v996, %v1444
    %v1509 = vmul.f32 %v997, %v1445
    %v1510 = vmul.f32 %v998, %v1446
    %v1511 = vmul.f32 %v999, %v1447
    %v1512 = vlaneseq
    %v1513 = vshrl.u32 %v1512, 7
    %v1514 = vsub.s32 1, %v1513
    %v1515 = vrot.slane %v21, %v1514
    %v1516 = vmul.f32 %v1448, %v1515
    %v1517 = vmul.f32 %v1449, %v1515
    %v1518 = vmul.f32 %v1450, %v1515
    %v1519 = vmul.f32 %v1451, %v1515
    %v1520 = vmul.f32 %v1452, %v1515
    %v1521 = vmul.f32 %v1453, %v1515
    %v1522 = vmul.f32 %v1454, %v1515
    %v1523 = vmul.f32 %v1455, %v1515
    %v1524 = vmul.f32 %v1456, %v1515
    %v1525 = vmul.f32 %v1457, %v1515
    %v1526 = vmul.f32 %v1458, %v1515
    %v1527 = vmul.f32 %v1459, %v1515
    %v1528 = vmul.f32 %v1460, %v1515
    %v1529 = vmul.f32 %v1461, %v1515
    %v1530 = vmul.f32 %v1462, %v1515
    %v1531 = vmul.f32 %v1463, %v1515
    %v1532 = vmul.f32 %v1464, %v1515
    %v1533 = vmul.f32 %v1465, %v1515
    %v1534 = vmul.f32 %v1466, %v1515
    %v1535 = vmul.f32 %v1467, %v1515
    %v1536 = vmul.f32 %v1468, %v1515
    %v1537 = vmul.f32 %v1469, %v1515
    %v1538 = vmul.f32 %v1470, %v1515
    %v1539 = vmul.f32 %v1471, %v1515
    %v1540 = vmul.f32 %v1472, %v1515
    %v1541 = vmul.f32 %v1473, %v1515
    %v1542 = vmul.f32 %v1474, %v1515
    %v1543 = vmul.f32 %v1475, %v1515
    %v1544 = vmul.f32 %v1476, %v1515
    %v1545 = vmul.f32 %v1477, %v1515
    %v1546 = vmul.f32 %v1478, %v1515
    %v1547 = vmul.f32 %v1479, %v1515
    %v1548 = vmul.f32 %v1480, %v1515
    %v1549 = vmul.f32 %v1481, %v1515
    %v1550 = vmul.f32 %v1482, %v1515
    %v1551 = vmul.f32 %v1483, %v1515
    %v1552 = vmul.f32 %v1484, %v1515
    %v1553 = vmul.f32 %v1485, %v1515
    %v1554 = vmul.f32 %v1486, %v1515
    %v1555 = vmul.f32 %v1487, %v1515
    %v1556 = vmul.f32 %v1488, %v1515
    %v1557 = vmul.f32 %v1489, %v1515
    %v1558 = vmul.f32 %v1490, %v1515
    %v1559 = vmul.f32 %v1491, %v1515
    %v1560 = vmul.f32 %v1492, %v1515
    %v1561 = vmul.f32 %v1493, %v1515
    %v1562 = vmul.f32 %v1494, %v1515
    %v1563 = vmul.f32 %v1495, %v1515
    %v1564 = vmul.f32 %v1496, %v1515
    %v1565 = vmul.f32 %v1497, %v1515
    %v1566 = vmul.f32 %v1498, %v1515
    %v1567 = vmul.f32 %v1499, %v1515
    %v1568 = vmul.f32 %v1500, %v1515
    %v1569 = vmul.f32 %v1501, %v1515
    %v1570 = vmul.f32 %v1502, %v1515
    %v1571 = vmul.f32 %v1503, %v1515
    %v1572 = vmul.f32 %v1504, %v1515
    %v1573 = vmul.f32 %v1505, %v1515
    %v1574 = vmul.f32 %v1506, %v1515
    %v1575 = vmul.f32 %v1507, %v1515
    %v1576 = vmul.f32 %v1508, %v1515
    %v1577 = vmul.f32 %v1509, %v1515
    %v1578 = vmul.f32 %v1510, %v1515
    %v1579 = vmul.f32 %v1511, %v1515
    %v1580 = vlaneseq
    %v1581 = vshrl.u32 %v1580, 7
    %v1582 = vsub.s32 2, %v1581
    %v1583 = vrot.slane %v21, %v1582
    %v1584 = vadd.f32 %v1516, %v1583
    %v1585 = vadd.f32 %v1517, %v1583
    %v1586 = vadd.f32 %v1518, %v1583
    %v1587 = vadd.f32 %v1519, %v1583
    %v1588 = vadd.f32 %v1520, %v1583
    %v1589 = vadd.f32 %v1521, %v1583
    %v1590 = vadd.f32 %v1522, %v1583
    %v1591 = vadd.f32 %v1523, %v1583
    %v1592 = vadd.f32 %v1524, %v1583
    %v1593 = vadd.f32 %v1525, %v1583
    %v1594 = vadd.f32 %v1526, %v1583
    %v1595 = vadd.f32 %v1527, %v1583
    %v1596 = vadd.f32 %v1528, %v1583
    %v1597 = vadd.f32 %v1529, %v1583
    %v1598 = vadd.f32 %v1530, %v1583
    %v1599 = vadd.f32 %v1531, %v1583
    %v1600 = vadd.f32 %v1532, %v1583
    %v1601 = vadd.f32 %v1533, %v1583
    %v1602 = vadd.f32 %v1534, %v1583
    %v1603 = vadd.f32 %v1535, %v1583
    %v1604 = vadd.f32 %v1536, %v1583
    %v1605 = vadd.f32 %v1537, %v1583
    %v1606 = vadd.f32 %v1538, %v1583
    %v1607 = vadd.f32 %v1539, %v1583
    %v1608 = vadd.f32 %v1540, %v1583
    %v1609 = vadd.f32 %v1541, %v1583
    %v1610 = vadd.f32 %v1542, %v1583
    %v1611 = vadd.f32 %v1543, %v1583
    %v1612 = vadd.f32 %v1544, %v1583
    %v1613 = vadd.f32 %v1545, %v1583
    %v1614 = vadd.f32 %v1546, %v1583
    %v1615 = vadd.f32 %v1547, %v1583
    %v1616 = vadd.f32 %v1548, %v1583
    %v1617 = vadd.f32 %v1549, %v1583
    %v1618 = vadd.f32 %v1550, %v1583
    %v1619 = vadd.f32 %v1551, %v1583
    %v1620 = vadd.f32 %v1552, %v1583
    %v1621 = vadd.f32 %v1553, %v1583
    %v1622 = vadd.f32 %v1554, %v1583
    %v1623 = vadd.f32 %v1555, %v1583
    %v1624 = vadd.f32 %v1556, %v1583
    %v1625 = vadd.f32 %v1557, %v1583
    %v1626 = vadd.f32 %v1558, %v1583
    %v1627 = vadd.f32 %v1559, %v1583
    %v1628 = vadd.f32 %v1560, %v1583
    %v1629 = vadd.f32 %v1561, %v1583
    %v1630 = vadd.f32 %v1562, %v1583
    %v1631 = vadd.f32 %v1563, %v1583
    %v1632 = vadd.f32 %v1564, %v1583
    %v1633 = vadd.f32 %v1565, %v1583
    %v1634 = vadd.f32 %v1566, %v1583
    %v1635 = vadd.f32 %v1567, %v1583
    %v1636 = vadd.f32 %v1568, %v1583
    %v1637 = vadd.f32 %v1569, %v1583
    %v1638 = vadd.f32 %v1570, %v1583
    %v1639 = vadd.f32 %v1571, %v1583
    %v1640 = vadd.f32 %v1572, %v1583
    %v1641 = vadd.f32 %v1573, %v1583
    %v1642 = vadd.f32 %v1574, %v1583
    %v1643 = vadd.f32 %v1575, %v1583
    %v1644 = vadd.f32 %v1576, %v1583
    %v1645 = vadd.f32 %v1577, %v1583
    %v1646 = vadd.f32 %v1578, %v1583
    %v1647 = vadd.f32 %v1579, %v1583
    %v1648 = vmul.f32 %v1584, 0.5
    %v1649 = vmul.f32 %v1585, 0.5
    %v1650 = vmul.f32 %v1586, 0.5
    %v1651 = vmul.f32 %v1587, 0.5
    %v1652 = vmul.f32 %v1588, 0.5
    %v1653 = vmul.f32 %v1589, 0.5
    %v1654 = vmul.f32 %v1590, 0.5
    %v1655 = vmul.f32 %v1591, 0.5
    %v1656 = vmul.f32 %v1592, 0.5
    %v1657 = vmul.f32 %v1593, 0.5
    %v1658 = vmul.f32 %v1594, 0.5
    %v1659 = vmul.f32 %v1595, 0.5
    %v1660 = vmul.f32 %v1596, 0.5
    %v1661 = vmul.f32 %v1597, 0.5
    %v1662 = vmul.f32 %v1598, 0.5
    %v1663 = vmul.f32 %v1599, 0.5
    %v1664 = vmul.f32 %v1600, 0.5
    %v1665 = vmul.f32 %v1601, 0.5
    %v1666 = vmul.f32 %v1602, 0.5
    %v1667 = vmul.f32 %v1603, 0.5
    %v1668 = vmul.f32 %v1604, 0.5
    %v1669 = vmul.f32 %v1605, 0.5
    %v1670 = vmul.f32 %v1606, 0.5
    %v1671 = vmul.f32 %v1607, 0.5
    %v1672 = vmul.f32 %v1608, 0.5
    %v1673 = vmul.f32 %v1609, 0.5
    %v1674 = vmul.f32 %v1610, 0.5
    %v1675 = vmul.f32 %v1611, 0.5
    %v1676 = vmul.f32 %v1612, 0.5
    %v1677 = vmul.f32 %v1613, 0.5
    %v1678 = vmul.f32 %v1614, 0.5
    %v1679 = vmul.f32 %v1615, 0.5
    %v1680 = vmul.f32 %v1616, 0.5
    %v1681 = vmul.f32 %v1617, 0.5
    %v1682 = vmul.f32 %v1618, 0.5
    %v1683 = vmul.f32 %v1619, 0.5
    %v1684 = vmul.f32 %v1620, 0.5
    %v1685 = vmul.f32 %v1621, 0.5
    %v1686 = vmul.f32 %v1622, 0.5
    %v1687 = vmul.f32 %v1623, 0.5
    %v1688 = vmul.f32 %v1624, 0.5
    %v1689 = vmul.f32 %v1625, 0.5
    %v1690 = vmul.f32 %v1626, 0.5
    %v1691 = vmul.f32 %v1627, 0.5
    %v1692 = vmul.f32 %v1628, 0.5
    %v1693 = vmul.f32 %v1629, 0.5
    %v1694 = vmul.f32 %v1630, 0.5
    %v1695 = vmul.f32 %v1631, 0.5
    %v1696 = vmul.f32 %v1632, 0.5
    %v1697 = vmul.f32 %v1633, 0.5
    %v1698 = vmul.f32 %v1634, 0.5
    %v1699 = vmul.f32 %v1635, 0.5
    %v1700 = vmul.f32 %v1636, 0.5
    %v1701 = vmul.f32 %v1637, 0.5
    %v1702 = vmul.f32 %v1638, 0.5
    %v1703 = vmul.f32 %v1639, 0.5
    %v1704 = vmul.f32 %v1640, 0.5
    %v1705 = vmul.f32 %v1641, 0.5
    %v1706 = vmul.f32 %v1642, 0.5
    %v1707 = vmul.f32 %v1643, 0.5
    %v1708 = vmul.f32 %v1644, 0.5
    %v1709 = vmul.f32 %v1645, 0.5
    %v1710 = vmul.f32 %v1646, 0.5
    %v1711 = vmul.f32 %v1647, 0.5
    %v1712 = vmul.f32 %v1584, 0.70710677
    %v1713 = vmul.f32 %v1585, 0.70710677
    %v1714 = vmul.f32 %v1586, 0.70710677
    %v1715 = vmul.f32 %v1587, 0.70710677
    %v1716 = vmul.f32 %v1588, 0.70710677
    %v1717 = vmul.f32 %v1589, 0.70710677
    %v1718 = vmul.f32 %v1590, 0.70710677
    %v1719 = vmul.f32 %v1591, 0.70710677
    %v1720 = vmul.f32 %v1592, 0.70710677
    %v1721 = vmul.f32 %v1593, 0.70710677
    %v1722 = vmul.f32 %v1594, 0.70710677
    %v1723 = vmul.f32 %v1595, 0.70710677
    %v1724 = vmul.f32 %v1596, 0.70710677
    %v1725 = vmul.f32 %v1597, 0.70710677
    %v1726 = vmul.f32 %v1598, 0.70710677
    %v1727 = vmul.f32 %v1599, 0.70710677
    %v1728 = vmul.f32 %v1600, 0.70710677
    %v1729 = vmul.f32 %v1601, 0.70710677
    %v1730 = vmul.f32 %v1602, 0.70710677
    %v1731 = vmul.f32 %v1603, 0.70710677
    %v1732 = vmul.f32 %v1604, 0.70710677
    %v1733 = vmul.f32 %v1605, 0.70710677
    %v1734 = vmul.f32 %v1606, 0.70710677
    %v1735 = vmul.f32 %v1607, 0.70710677
    %v1736 = vmul.f32 %v1608, 0.70710677
    %v1737 = vmul.f32 %v1609, 0.70710677
    %v1738 = vmul.f32 %v1610, 0.70710677
    %v1739 = vmul.f32 %v1611, 0.70710677
    %v1740 = vmul.f32 %v1612, 0.70710677
    %v1741 = vmul.f32 %v1613, 0.70710677
    %v1742 = vmul.f32 %v1614, 0.70710677
    %v1743 = vmul.f32 %v1615, 0.70710677
    %v1744 = vmul.f32 %v1616, 0.70710677
    %v1745 = vmul.f32 %v1617, 0.70710677
    %v1746 = vmul.f32 %v1618, 0.70710677
    %v1747 = vmul.f32 %v1619, 0.70710677
    %v1748 = vmul.f32 %v1620, 0.70710677
    %v1749 = vmul.f32 %v1621, 0.70710677
    %v1750 = vmul.f32 %v1622, 0.70710677
    %v1751 = vmul.f32 %v1623, 0.70710677
    %v1752 = vmul.f32 %v1624, 0.70710677
    %v1753 = vmul.f32 %v1625, 0.70710677
    %v1754 = vmul.f32 %v1626, 0.70710677
    %v1755 = vmul.f32 %v1627, 0.70710677
    %v1756 = vmul.f32 %v1628, 0.70710677
    %v1757 = vmul.f32 %v1629, 0.70710677
    %v1758 = vmul.f32 %v1630, 0.70710677
    %v1759 = vmul.f32 %v1631, 0.70710677
    %v1760 = vmul.f32 %v1632, 0.70710677
    %v1761 = vmul.f32 %v1633, 0.70710677
    %v1762 = vmul.f32 %v1634, 0.70710677
    %v1763 = vmul.f32 %v1635, 0.70710677
    %v1764 = vmul.f32 %v1636, 0.70710677
    %v1765 = vmul.f32 %v1637, 0.70710677
    %v1766 = vmul.f32 %v1638, 0.70710677
    %v1767 = vmul.f32 %v1639, 0.70710677
    %v1768 = vmul.f32 %v1640, 0.70710677
    %v1769 = vmul.f32 %v1641, 0.70710677
    %v1770 = vmul.f32 %v1642, 0.70710677
    %v1771 = vmul.f32 %v1643, 0.70710677
    %v1772 = vmul.f32 %v1644, 0.70710677
    %v1773 = vmul.f32 %v1645, 0.70710677
    %v1774 = vmul.f32 %v1646, 0.70710677
    %v1775 = vmul.f32 %v1647, 0.70710677
    %v1776 = verf.f32.pop %v1712
    %v1777 = verf.f32.pop %v1713
    %v1778 = verf.f32.pop %v1714
    %v1779 = verf.f32.pop %v1715
    %v1780 = verf.f32.pop %v1716
    %v1781 = verf.f32.pop %v1717
    %v1782 = verf.f32.pop %v1718
    %v1783 = verf.f32.pop %v1719
    %v1784 = verf.f32.pop %v1720
    %v1785 = verf.f32.pop %v1721
    %v1786 = verf.f32.pop %v1722
    %v1787 = verf.f32.pop %v1723
    %v1788 = verf.f32.pop %v1724
    %v1789 = verf.f32.pop %v1725
    %v1790 = verf.f32.pop %v1726
    %v1791 = verf.f32.pop %v1727
    %v1792 = verf.f32.pop %v1728
    %v1793 = verf.f32.pop %v1729
    %v1794 = verf.f32.pop %v1730
    %v1795 = verf.f32.pop %v1731
    %v1796 = verf.f32.pop %v1732
    %v1797 = verf.f32.pop %v1733
    %v1798 = verf.f32.pop %v1734
    %v1799 = verf.f32.pop %v1735
    %v1800 = verf.f32.pop %v1736
    %v1801 = verf.f32.pop %v1737
    %v1802 = verf.f32.pop %v1738
    %v1803 = verf.f32.pop %v1739
    %v1804 = verf.f32.pop %v1740
    %v1805 = verf.f32.pop %v1741
    %v1806 = verf.f32.pop %v1742
    %v1807 = verf.f32.pop %v1743
    %v1808 = verf.f32.pop %v1744
    %v1809 = verf.f32.pop %v1745
    %v1810 = verf.f32.pop %v1746
    %v1811 = verf.f32.pop %v1747
    %v1812 = verf.f32.pop %v1748
    %v1813 = verf.f32.pop %v1749
    %v1814 = verf.f32.pop %v1750
    %v1815 = verf.f32.pop %v1751
    %v1816 = verf.f32.pop %v1752
    %v1817 = verf.f32.pop %v1753
    %v1818 = verf.f32.pop %v1754
    %v1819 = verf.f32.pop %v1755
    %v1820 = verf.f32.pop %v1756
    %v1821 = verf.f32.pop %v1757
    %v1822 = verf.f32.pop %v1758
    %v1823 = verf.f32.pop %v1759
    %v1824 = verf.f32.pop %v1760
    %v1825 = verf.f32.pop %v1761
    %v1826 = verf.f32.pop %v1762
    %v1827 = verf.f32.pop %v1763
    %v1828 = verf.f32.pop %v1764
    %v1829 = verf.f32.pop %v1765
    %v1830 = verf.f32.pop %v1766
    %v1831 = verf.f32.pop %v1767
    %v1832 = verf.f32.pop %v1768
    %v1833 = verf.f32.pop %v1769
    %v1834 = verf.f32.pop %v1770
    %v1835 = verf.f32.pop %v1771
    %v1836 = verf.f32.pop %v1772
    %v1837 = verf.f32.pop %v1773
    %v1838 = verf.f32.pop %v1774
    %v1839 = verf.f32.pop %v1775
    %v1840 = vadd.f32 %v1776, 1.0
    %v1841 = vadd.f32 %v1777, 1.0
    %v1842 = vadd.f32 %v1778, 1.0
    %v1843 = vadd.f32 %v1779, 1.0
    %v1844 = vadd.f32 %v1780, 1.0
    %v1845 = vadd.f32 %v1781, 1.0
    %v1846 = vadd.f32 %v1782, 1.0
    %v1847 = vadd.f32 %v1783, 1.0
    %v1848 = vadd.f32 %v1784, 1.0
    %v1849 = vadd.f32 %v1785, 1.0
    %v1850 = vadd.f32 %v1786, 1.0
    %v1851 = vadd.f32 %v1787, 1.0
    %v1852 = vadd.f32 %v1788, 1.0
    %v1853 = vadd.f32 %v1789, 1.0
    %v1854 = vadd.f32 %v1790, 1.0
    %v1855 = vadd.f32 %v1791, 1.0
    %v1856 = vadd.f32 %v1792, 1.0
    %v1857 = vadd.f32 %v1793, 1.0
    %v1858 = vadd.f32 %v1794, 1.0
    %v1859 = vadd.f32 %v1795, 1.0
    %v1860 = vadd.f32 %v1796, 1.0
    %v1861 = vadd.f32 %v1797, 1.0
    %v1862 = vadd.f32 %v1798, 1.0
    %v1863 = vadd.f32 %v1799, 1.0
    %v1864 = vadd.f32 %v1800, 1.0
    %v1865 = vadd.f32 %v1801, 1.0
    %v1866 = vadd.f32 %v1802, 1.0
    %v1867 = vadd.f32 %v1803, 1.0
    %v1868 = vadd.f32 %v1804, 1.0
    %v1869 = vadd.f32 %v1805, 1.0
    %v1870 = vadd.f32 %v1806, 1.0
    %v1871 = vadd.f32 %v1807, 1.0
    %v1872 = vadd.f32 %v1808, 1.0
    %v1873 = vadd.f32 %v1809, 1.0
    %v1874 = vadd.f32 %v1810, 1.0
    %v1875 = vadd.f32 %v1811, 1.0
    %v1876 = vadd.f32 %v1812, 1.0
    %v1877 = vadd.f32 %v1813, 1.0
    %v1878 = vadd.f32 %v1814, 1.0
    %v1879 = vadd.f32 %v1815, 1.0
    %v1880 = vadd.f32 %v1816, 1.0
    %v1881 = vadd.f32 %v1817, 1.0
    %v1882 = vadd.f32 %v1818, 1.0
    %v1883 = vadd.f32 %v1819, 1.0
    %v1884 = vadd.f32 %v1820, 1.0
    %v1885 = vadd.f32 %v1821, 1.0
    %v1886 = vadd.f32 %v1822, 1.0
    %v1887 = vadd.f32 %v1823, 1.0
    %v1888 = vadd.f32 %v1824, 1.0
    %v1889 = vadd.f32 %v1825, 1.0
    %v1890 = vadd.f32 %v1826, 1.0
    %v1891 = vadd.f32 %v1827, 1.0
    %v1892 = vadd.f32 %v1828, 1.0
    %v1893 = vadd.f32 %v1829, 1.0
    %v1894 = vadd.f32 %v1830, 1.0
    %v1895 = vadd.f32 %v1831, 1.0
    %v1896 = vadd.f32 %v1832, 1.0
    %v1897 = vadd.f32 %v1833, 1.0
    %v1898 = vadd.f32 %v1834, 1.0
    %v1899 = vadd.f32 %v1835, 1.0
    %v1900 = vadd.f32 %v1836, 1.0
    %v1901 = vadd.f32 %v1837, 1.0
    %v1902 = vadd.f32 %v1838, 1.0
    %v1903 = vadd.f32 %v1839, 1.0
    %v1904 = vmul.f32 %v1648, %v1840
    %v1905 = vmul.f32 %v1649, %v1841
    %v1906 = vmul.f32 %v1650, %v1842
    %v1907 = vmul.f32 %v1651, %v1843
    %v1908 = vmul.f32 %v1652, %v1844
    %v1909 = vmul.f32 %v1653, %v1845
    %v1910 = vmul.f32 %v1654, %v1846
    %v1911 = vmul.f32 %v1655, %v1847
    %v1912 = vmul.f32 %v1656, %v1848
    %v1913 = vmul.f32 %v1657, %v1849
    %v1914 = vmul.f32 %v1658, %v1850
    %v1915 = vmul.f32 %v1659, %v1851
    %v1916 = vmul.f32 %v1660, %v1852
    %v1917 = vmul.f32 %v1661, %v1853
    %v1918 = vmul.f32 %v1662, %v1854
    %v1919 = vmul.f32 %v1663, %v1855
    %v1920 = vmul.f32 %v1664, %v1856
    %v1921 = vmul.f32 %v1665, %v1857
    %v1922 = vmul.f32 %v1666, %v1858
    %v1923 = vmul.f32 %v1667, %v1859
    %v1924 = vmul.f32 %v1668, %v1860
    %v1925 = vmul.f32 %v1669, %v1861
    %v1926 = vmul.f32 %v1670, %v1862
    %v1927 = vmul.f32 %v1671, %v1863
    %v1928 = vmul.f32 %v1672, %v1864
    %v1929 = vmul.f32 %v1673, %v1865
    %v1930 = vmul.f32 %v1674, %v1866
    %v1931 = vmul.f32 %v1675, %v1867
    %v1932 = vmul.f32 %v1676, %v1868
    %v1933 = vmul.f32 %v1677, %v1869
    %v1934 = vmul.f32 %v1678, %v1870
    %v1935 = vmul.f32 %v1679, %v1871
    %v1936 = vmul.f32 %v1680, %v1872
    %v1937 = vmul.f32 %v1681, %v1873
    %v1938 = vmul.f32 %v1682, %v1874
    %v1939 = vmul.f32 %v1683, %v1875
    %v1940 = vmul.f32 %v1684, %v1876
    %v1941 = vmul.f32 %v1685, %v1877
    %v1942 = vmul.f32 %v1686, %v1878
    %v1943 = vmul.f32 %v1687, %v1879
    %v1944 = vmul.f32 %v1688, %v1880
    %v1945 = vmul.f32 %v1689, %v1881
    %v1946 = vmul.f32 %v1690, %v1882
    %v1947 = vmul.f32 %v1691, %v1883
    %v1948 = vmul.f32 %v1692, %v1884
    %v1949 = vmul.f32 %v1693, %v1885
    %v1950 = vmul.f32 %v1694, %v1886
    %v1951 = vmul.f32 %v1695, %v1887
    %v1952 = vmul.f32 %v1696, %v1888
    %v1953 = vmul.f32 %v1697, %v1889
    %v1954 = vmul.f32 %v1698, %v1890
    %v1955 = vmul.f32 %v1699, %v1891
    %v1956 = vmul.f32 %v1700, %v1892
    %v1957 = vmul.f32 %v1701, %v1893
    %v1958 = vmul.f32 %v1702, %v1894
    %v1959 = vmul.f32 %v1703, %v1895
    %v1960 = vmul.f32 %v1704, %v1896
    %v1961 = vmul.f32 %v1705, %v1897
    %v1962 = vmul.f32 %v1706, %v1898
    %v1963 = vmul.f32 %v1707, %v1899
    %v1964 = vmul.f32 %v1708, %v1900
    %v1965 = vmul.f32 %v1709, %v1901
    %v1966 = vmul.f32 %v1710, %v1902
    %v1967 = vmul.f32 %v1711, %v1903
    %1984 = vrot.lane.b32.xlu0 %v1920, 8
    %v1985 = vpop.permute.xlu0 %1984
    %1986 = vrot.lane.b32.xlu0 %v1921, 8
    %v1987 = vpop.permute.xlu0 %1986
    %1988 = vrot.lane.b32.xlu0 %v1922, 8
    %v1989 = vpop.permute.xlu0 %1988
    %1990 = vrot.lane.b32.xlu0 %v1923, 8
    %v1991 = vpop.permute.xlu0 %1990
    %1992 = vrot.lane.b32.xlu0 %v1924, 8
    %v1993 = vpop.permute.xlu0 %1992
    %1994 = vrot.lane.b32.xlu0 %v1925, 8
    %v1995 = vpop.permute.xlu0 %1994
    %1996 = vrot.lane.b32.xlu0 %v1926, 8
    %v1997 = vpop.permute.xlu0 %1996
    %1998 = vrot.lane.b32.xlu0 %v1927, 8
    %v1999 = vpop.permute.xlu0 %1998
    %2000 = vrot.lane.b32.xlu0 %v1928, 8
    %v2001 = vpop.permute.xlu0 %2000
    %2002 = vrot.lane.b32.xlu0 %v1929, 8
    %v2003 = vpop.permute.xlu0 %2002
    %2004 = vrot.lane.b32.xlu0 %v1930, 8
    %v2005 = vpop.permute.xlu0 %2004
    %2006 = vrot.lane.b32.xlu0 %v1931, 8
    %v2007 = vpop.permute.xlu0 %2006
    %2008 = vrot.lane.b32.xlu0 %v1932, 8
    %v2009 = vpop.permute.xlu0 %2008
    %2010 = vrot.lane.b32.xlu0 %v1933, 8
    %v2011 = vpop.permute.xlu0 %2010
    %2012 = vrot.lane.b32.xlu0 %v1934, 8
    %v2013 = vpop.permute.xlu0 %2012
    %2014 = vrot.lane.b32.xlu0 %v1935, 8
    %v2015 = vpop.permute.xlu0 %2014
    %2048 = vrot.lane.b32.xlu0 %v1936, 16
    %v2049 = vpop.permute.xlu0 %2048
    %2050 = vrot.lane.b32.xlu0 %v1937, 16
    %v2051 = vpop.permute.xlu0 %2050
    %2052 = vrot.lane.b32.xlu0 %v1938, 16
    %v2053 = vpop.permute.xlu0 %2052
    %2054 = vrot.lane.b32.xlu0 %v1939, 16
    %v2055 = vpop.permute.xlu0 %2054
    %2056 = vrot.lane.b32.xlu0 %v1940, 16
    %v2057 = vpop.permute.xlu0 %2056
    %2058 = vrot.lane.b32.xlu0 %v1941, 16
    %v2059 = vpop.permute.xlu0 %2058
    %2060 = vrot.lane.b32.xlu0 %v1942, 16
    %v2061 = vpop.permute.xlu0 %2060
    %2062 = vrot.lane.b32.xlu0 %v1943, 16
    %v2063 = vpop.permute.xlu0 %2062
    %2064 = vrot.lane.b32.xlu0 %v1944, 16
    %v2065 = vpop.permute.xlu0 %2064
    %2066 = vrot.lane.b32.xlu0 %v1945, 16
    %v2067 = vpop.permute.xlu0 %2066
    %2068 = vrot.lane.b32.xlu0 %v1946, 16
    %v2069 = vpop.permute.xlu0 %2068
    %2070 = vrot.lane.b32.xlu0 %v1947, 16
    %v2071 = vpop.permute.xlu0 %2070
    %2072 = vrot.lane.b32.xlu0 %v1948, 16
    %v2073 = vpop.permute.xlu0 %2072
    %2074 = vrot.lane.b32.xlu0 %v1949, 16
    %v2075 = vpop.permute.xlu0 %2074
    %2076 = vrot.lane.b32.xlu0 %v1950, 16
    %v2077 = vpop.permute.xlu0 %2076
    %2078 = vrot.lane.b32.xlu0 %v1951, 16
    %v2079 = vpop.permute.xlu0 %2078
    %2112 = vrot.lane.b32.xlu0 %v1952, 24
    %v2113 = vpop.permute.xlu0 %2112
    %2114 = vrot.lane.b32.xlu0 %v1953, 24
    %v2115 = vpop.permute.xlu0 %2114
    %2116 = vrot.lane.b32.xlu0 %v1954, 24
    %v2117 = vpop.permute.xlu0 %2116
    %2118 = vrot.lane.b32.xlu0 %v1955, 24
    %v2119 = vpop.permute.xlu0 %2118
    %2120 = vrot.lane.b32.xlu0 %v1956, 24
    %v2121 = vpop.permute.xlu0 %2120
    %2122 = vrot.lane.b32.xlu0 %v1957, 24
    %v2123 = vpop.permute.xlu0 %2122
    %2124 = vrot.lane.b32.xlu0 %v1958, 24
    %v2125 = vpop.permute.xlu0 %2124
    %2126 = vrot.lane.b32.xlu0 %v1959, 24
    %v2127 = vpop.permute.xlu0 %2126
    %2128 = vrot.lane.b32.xlu0 %v1960, 24
    %v2129 = vpop.permute.xlu0 %2128
    %2130 = vrot.lane.b32.xlu0 %v1961, 24
    %v2131 = vpop.permute.xlu0 %2130
    %2132 = vrot.lane.b32.xlu0 %v1962, 24
    %v2133 = vpop.permute.xlu0 %2132
    %2134 = vrot.lane.b32.xlu0 %v1963, 24
    %v2135 = vpop.permute.xlu0 %2134
    %2136 = vrot.lane.b32.xlu0 %v1964, 24
    %v2137 = vpop.permute.xlu0 %2136
    %2138 = vrot.lane.b32.xlu0 %v1965, 24
    %v2139 = vpop.permute.xlu0 %2138
    %2140 = vrot.lane.b32.xlu0 %v1966, 24
    %v2141 = vpop.permute.xlu0 %2140
    %2142 = vrot.lane.b32.xlu0 %v1967, 24
    %v2143 = vpop.permute.xlu0 %2142
    %v2160 = vsel %vm678, %v1904, %v1985
    %v2161 = vsel %vm678, %v1905, %v1987
    %v2162 = vsel %vm678, %v1906, %v1989
    %v2163 = vsel %vm678, %v1907, %v1991
    %v2164 = vsel %vm678, %v1908, %v1993
    %v2165 = vsel %vm678, %v1909, %v1995
    %v2166 = vsel %vm678, %v1910, %v1997
    %v2167 = vsel %vm678, %v1911, %v1999
    %v2168 = vsel %vm678, %v1912, %v2001
    %v2169 = vsel %vm678, %v1913, %v2003
    %v2170 = vsel %vm678, %v1914, %v2005
    %v2171 = vsel %vm678, %v1915, %v2007
    %v2172 = vsel %vm678, %v1916, %v2009
    %v2173 = vsel %vm678, %v1917, %v2011
    %v2174 = vsel %vm678, %v1918, %v2013
    %v2175 = vsel %vm678, %v1919, %v2015
    %vm2176 = vcmask 130048
    %v2177 = vsel %vm2176, %v2160, %v2049
    %v2178 = vsel %vm2176, %v2161, %v2051
    %v2179 = vsel %vm2176, %v2162, %v2053
    %v2180 = vsel %vm2176, %v2163, %v2055
    %v2181 = vsel %vm2176, %v2164, %v2057
    %v2182 = vsel %vm2176, %v2165, %v2059
    %v2183 = vsel %vm2176, %v2166, %v2061
    %v2184 = vsel %vm2176, %v2167, %v2063
    %v2185 = vsel %vm2176, %v2168, %v2065
    %v2186 = vsel %vm2176, %v2169, %v2067
    %v2187 = vsel %vm2176, %v2170, %v2069
    %v2188 = vsel %vm2176, %v2171, %v2071
    %v2189 = vsel %vm2176, %v2172, %v2073
    %v2190 = vsel %vm2176, %v2173, %v2075
    %v2191 = vsel %vm2176, %v2174, %v2077
    %v2192 = vsel %vm2176, %v2175, %v2079
    %vm2193 = vcmask 195584
    %v2194 = vsel %vm2193, %v2177, %v2113
    %v2195 = vsel %vm2193, %v2178, %v2115
    %v2196 = vsel %vm2193, %v2179, %v2117
    %v2197 = vsel %vm2193, %v2180, %v2119
    %v2198 = vsel %vm2193, %v2181, %v2121
    %v2199 = vsel %vm2193, %v2182, %v2123
    %v2200 = vsel %vm2193, %v2183, %v2125
    %v2201 = vsel %vm2193, %v2184, %v2127
    %v2202 = vsel %vm2193, %v2185, %v2129
    %v2203 = vsel %vm2193, %v2186, %v2131
    %v2204 = vsel %vm2193, %v2187, %v2133
    %v2205 = vsel %vm2193, %v2188, %v2135
    %v2206 = vsel %vm2193, %v2189, %v2137
    %v2207 = vsel %vm2193, %v2190, %v2139
    %v2208 = vsel %vm2193, %v2191, %v2141
    %v2209 = vsel %vm2193, %v2192, %v2143
    %v2210 = vlaneseq
    %v2211 = vshrl.u32 %v2210, 7
    %v2212 = vsub.s32 3, %v2211
    %v2213 = vrot.slane %v21, %v2212
    %vm2214 = vcmask 261120
    %v2216 = vsel %vm2214, %v2194, 0
    %v2219 = vsel %vm2214, %v2195, 0
    %v2222 = vsel %vm2214, %v2196, 0
    %v2225 = vsel %vm2214, %v2197, 0
    %v2228 = vsel %vm2214, %v2198, 0
    %v2231 = vsel %vm2214, %v2199, 0
    %v2234 = vsel %vm2214, %v2200, 0
    %v2237 = vsel %vm2214, %v2201, 0
    %v2240 = vsel %vm2214, %v2202, 0
    %v2243 = vsel %vm2214, %v2203, 0
    %v2246 = vsel %vm2214, %v2204, 0
    %v2249 = vsel %vm2214, %v2205, 0
    %v2252 = vsel %vm2214, %v2206, 0
    %v2255 = vsel %vm2214, %v2207, 0
    %v2258 = vsel %vm2214, %v2208, 0
    %v2261 = vsel %vm2214, %v2209, 0
    %2263 = vmatprep.subr.mxu0 0.0
    %2264 = vmatpush1.msra.mxu0 %v22
    %2265 = vmatprep.subr.mxu0 0.0
    %2266 = vmatpush1.msra.mxu0 %v23
    %2267 = vmatprep.subr.mxu0 0.0
    %2268 = vmatpush1.msra.mxu0 %v24
    %2269 = vmatprep.subr.mxu0 0.0
    %2270 = vmatpush1.msra.mxu0 %v25
    %2271 = vmatprep.subr.mxu0 0.0
    %2272 = vmatpush1.msra.mxu0 0.0
    %2273 = vmatprep.subr.mxu0 0.0
    %2274 = vmatpush1.msra.mxu0 0.0
    %2275 = vmatprep.subr.mxu0 0.0
    %2276 = vmatpush1.msra.mxu0 0.0
    %2277 = vmatprep.subr.mxu0 0.0
    %2278 = vmatpush1.msra.mxu0 0.0
    %2279 = vmatprep.subr.mxu0 0.0
    %2280 = vmatpush1.msra.mxu0 0.0
    %2281 = vmatprep.subr.mxu0 0.0
    %2282 = vmatpush1.msra.mxu0 0.0
    %2283 = vmatprep.subr.mxu0 0.0
    %2284 = vmatpush1.msra.mxu0 0.0
    %2285 = vmatprep.subr.mxu0 0.0
    %2286 = vmatpush1.msra.mxu0 0.0
    %2287 = vmatprep.subr.mxu0 0.0
    %2288 = vmatpush1.msra.mxu0 0.0
    %2289 = vmatprep.subr.mxu0 0.0
    %2290 = vmatpush1.msra.mxu0 0.0
    %2291 = vmatprep.subr.mxu0 0.0
    %2292 = vmatpush1.msra.mxu0 0.0
    %2293 = vmatprep.subr.mxu0 0.0
    %2294 = vmatpush1.msra.mxu0 0.0
    %2295 = vmatprep.subr.mxu0 0.0
    %2296 = vmatpush1.msra.mxu0 0.0
    %2297 = vmatprep.subr.mxu0 0.0
    %2298 = vmatpush1.msra.mxu0 0.0
    %2299 = vmatprep.subr.mxu0 0.0
    %2300 = vmatpush1.msra.mxu0 0.0
    %2301 = vmatprep.subr.mxu0 0.0
    %2302 = vmatpush1.msra.mxu0 0.0
    %2303 = vmatprep.subr.mxu0 0.0
    %2304 = vmatpush1.msra.mxu0 0.0
    %2305 = vmatprep.subr.mxu0 0.0
    %2306 = vmatpush1.msra.mxu0 0.0
    %2307 = vmatprep.subr.mxu0 0.0
    %2308 = vmatpush1.msra.mxu0 0.0
    %2309 = vmatprep.subr.mxu0 0.0
    %2310 = vmatpush1.msra.mxu0 0.0
    %2311 = vmatprep.subr.mxu0 0.0
    %2312 = vmatpush1.msra.mxu0 0.0
    %2313 = vmatprep.subr.mxu0 0.0
    %2314 = vmatpush1.msra.mxu0 0.0
    %2315 = vmatprep.subr.mxu0 0.0
    %2316 = vmatpush1.msra.mxu0 0.0
    %2317 = vmatprep.subr.mxu0 0.0
    %2318 = vmatpush1.msra.mxu0 0.0
    %2319 = vmatprep.subr.mxu0 0.0
    %2320 = vmatpush1.msra.mxu0 0.0
    %2321 = vmatprep.subr.mxu0 0.0
    %2322 = vmatpush1.msra.mxu0 0.0
    %2323 = vmatprep.subr.mxu0 0.0
    %2324 = vmatpush1.msra.mxu0 0.0
    %2325 = vmatprep.subr.mxu0 0.0
    %2326 = vmatpush1.msra.mxu0 0.0
    %2327 = vmatprep.mubr.f32.mxu0 0.0
    %2328 = vmatmul.mubr.f32.gmra.mrb[0].mxu0 %v2216
    %v2329 = vpop.f32.mrb[0].mxu0
    %v2330 = vadd.f32 %v2213, %v2329
    %v2331 = vpop.f32.mrb[0].mxu0
    %2332 = vmatprep.mubr.f32.mxu0 0.0
    %2333 = vmatmul.mubr.f32.gmra.mrb[0].mxu0 %v2219
    %v2334 = vpop.f32.mrb[0].mxu0
    %v2335 = vadd.f32 %v2213, %v2334
    %v2336 = vpop.f32.mrb[0].mxu0
    %2337 = vmatprep.mubr.f32.mxu0 0.0
    %2338 = vmatmul.mubr.f32.gmra.mrb[0].mxu0 %v2222
    %v2339 = vpop.f32.mrb[0].mxu0
    %v2340 = vadd.f32 %v2213, %v2339
    %v2341 = vpop.f32.mrb[0].mxu0
    %2342 = vmatprep.mubr.f32.mxu0 0.0
    %2343 = vmatmul.mubr.f32.gmra.mrb[0].mxu0 %v2225
    %v2344 = vpop.f32.mrb[0].mxu0
    %v2345 = vadd.f32 %v2213, %v2344
    %v2346 = vpop.f32.mrb[0].mxu0
    %2347 = vmatprep.mubr.f32.mxu0 0.0
    %2348 = vmatmul.mubr.f32.gmra.mrb[0].mxu0 %v2228
    %v2349 = vpop.f32.mrb[0].mxu0
    %v2350 = vadd.f32 %v2213, %v2349
    %v2351 = vpop.f32.mrb[0].mxu0
    %2352 = vmatprep.mubr.f32.mxu0 0.0
    %2353 = vmatmul.mubr.f32.gmra.mrb[0].mxu0 %v2231
    %v2354 = vpop.f32.mrb[0].mxu0
    %v2355 = vadd.f32 %v2213, %v2354
    %v2356 = vpop.f32.mrb[0].mxu0
    %2357 = vmatprep.mubr.f32.mxu0 0.0
    %2358 = vmatmul.mubr.f32.gmra.mrb[0].mxu0 %v2234
    %v2359 = vpop.f32.mrb[0].mxu0
    %v2360 = vadd.f32 %v2213, %v2359
    %v2361 = vpop.f32.mrb[0].mxu0
    %2362 = vmatprep.mubr.f32.mxu0 0.0
    %2363 = vmatmul.mubr.f32.gmra.mrb[0].mxu0 %v2237
    %v2364 = vpop.f32.mrb[0].mxu0
    %v2365 = vadd.f32 %v2213, %v2364
    %v2366 = vpop.f32.mrb[0].mxu0
    %2367 = vmatprep.mubr.f32.mxu0 0.0
    %2368 = vmatmul.mubr.f32.gmra.mrb[0].mxu0 %v2240
    %v2369 = vpop.f32.mrb[0].mxu0
    %v2370 = vadd.f32 %v2213, %v2369
    %v2371 = vpop.f32.mrb[0].mxu0
    %2372 = vmatprep.mubr.f32.mxu0 0.0
    %2373 = vmatmul.mubr.f32.gmra.mrb[0].mxu0 %v2243
    %v2374 = vpop.f32.mrb[0].mxu0
    %v2375 = vadd.f32 %v2213, %v2374
    %v2376 = vpop.f32.mrb[0].mxu0
    %2377 = vmatprep.mubr.f32.mxu0 0.0
    %2378 = vmatmul.mubr.f32.gmra.mrb[0].mxu0 %v2246
    %v2379 = vpop.f32.mrb[0].mxu0
    %v2380 = vadd.f32 %v2213, %v2379
    %v2381 = vpop.f32.mrb[0].mxu0
    %2382 = vmatprep.mubr.f32.mxu0 0.0
    %2383 = vmatmul.mubr.f32.gmra.mrb[0].mxu0 %v2249
    %v2384 = vpop.f32.mrb[0].mxu0
    %v2385 = vadd.f32 %v2213, %v2384
    %v2386 = vpop.f32.mrb[0].mxu0
    %2387 = vmatprep.mubr.f32.mxu0 0.0
    %2388 = vmatmul.mubr.f32.gmra.mrb[0].mxu0 %v2252
    %v2389 = vpop.f32.mrb[0].mxu0
    %v2390 = vadd.f32 %v2213, %v2389
    %v2391 = vpop.f32.mrb[0].mxu0
    %2392 = vmatprep.mubr.f32.mxu0 0.0
    %2393 = vmatmul.mubr.f32.gmra.mrb[0].mxu0 %v2255
    %v2394 = vpop.f32.mrb[0].mxu0
    %v2395 = vadd.f32 %v2213, %v2394
    %v2396 = vpop.f32.mrb[0].mxu0
    %2397 = vmatprep.mubr.f32.mxu0 0.0
    %2398 = vmatmul.mubr.f32.gmra.mrb[0].mxu0 %v2258
    %v2399 = vpop.f32.mrb[0].mxu0
    %v2400 = vadd.f32 %v2213, %v2399
    %v2401 = vpop.f32.mrb[0].mxu0
    %2402 = vmatprep.mubr.f32.mxu0 0.0
    %2403 = vmatmul.mubr.f32.gmra.mrb[0].mxu0 %v2261
    %v2404 = vpop.f32.mrb[0].mxu0
    %v2405 = vadd.f32 %v2213, %v2404
    %v2406 = vpop.f32.mrb[0].mxu0
    %2407 = vdwg.mxu0
    %v2408 = vsel %vm678, %v2330, 0.0
    %2409 = vadd.xlane.f32.xlu0 %v2408
    %v2410 = vpop.xlane.xlu0 %2409
    %v2411 = vsel %vm678, %v2335, 0.0
    %2412 = vadd.xlane.f32.xlu0 %v2411
    %v2413 = vpop.xlane.xlu0 %2412
    %v2414 = vsel %vm678, %v2340, 0.0
    %2415 = vadd.xlane.f32.xlu0 %v2414
    %v2416 = vpop.xlane.xlu0 %2415
    %v2417 = vsel %vm678, %v2345, 0.0
    %2418 = vadd.xlane.f32.xlu0 %v2417
    %v2419 = vpop.xlane.xlu0 %2418
    %v2420 = vsel %vm678, %v2350, 0.0
    %2421 = vadd.xlane.f32.xlu0 %v2420
    %v2422 = vpop.xlane.xlu0 %2421
    %v2423 = vsel %vm678, %v2355, 0.0
    %2424 = vadd.xlane.f32.xlu0 %v2423
    %v2425 = vpop.xlane.xlu0 %2424
    %v2426 = vsel %vm678, %v2360, 0.0
    %2427 = vadd.xlane.f32.xlu0 %v2426
    %v2428 = vpop.xlane.xlu0 %2427
    %v2429 = vsel %vm678, %v2365, 0.0
    %2430 = vadd.xlane.f32.xlu0 %v2429
    %v2431 = vpop.xlane.xlu0 %2430
    %v2432 = vsel %vm678, %v2370, 0.0
    %2433 = vadd.xlane.f32.xlu0 %v2432
    %v2434 = vpop.xlane.xlu0 %2433
    %v2435 = vsel %vm678, %v2375, 0.0
    %2436 = vadd.xlane.f32.xlu0 %v2435
    %v2437 = vpop.xlane.xlu0 %2436
    %v2438 = vsel %vm678, %v2380, 0.0
    %2439 = vadd.xlane.f32.xlu0 %v2438
    %v2440 = vpop.xlane.xlu0 %2439
    %v2441 = vsel %vm678, %v2385, 0.0
    %2442 = vadd.xlane.f32.xlu0 %v2441
    %v2443 = vpop.xlane.xlu0 %2442
    %v2444 = vsel %vm678, %v2390, 0.0
    %2445 = vadd.xlane.f32.xlu0 %v2444
    %v2446 = vpop.xlane.xlu0 %2445
    %v2447 = vsel %vm678, %v2395, 0.0
    %2448 = vadd.xlane.f32.xlu0 %v2447
    %v2449 = vpop.xlane.xlu0 %2448
    %v2450 = vsel %vm678, %v2400, 0.0
    %2451 = vadd.xlane.f32.xlu0 %v2450
    %v2452 = vpop.xlane.xlu0 %2451
    %v2453 = vsel %vm678, %v2405, 0.0
    %2454 = vadd.xlane.f32.xlu0 %v2453
    %v2455 = vpop.xlane.xlu0 %2454
    %v2456 = vmul.f32 %v2410, %v871
    %v2457 = vmul.f32 %v2413, %v871
    %v2458 = vmul.f32 %v2416, %v871
    %v2459 = vmul.f32 %v2419, %v871
    %v2460 = vmul.f32 %v2422, %v871
    %v2461 = vmul.f32 %v2425, %v871
    %v2462 = vmul.f32 %v2428, %v871
    %v2463 = vmul.f32 %v2431, %v871
    %v2464 = vmul.f32 %v2434, %v871
    %v2465 = vmul.f32 %v2437, %v871
    %v2466 = vmul.f32 %v2440, %v871
    %v2467 = vmul.f32 %v2443, %v871
    %v2468 = vmul.f32 %v2446, %v871
    %v2469 = vmul.f32 %v2449, %v871
    %v2470 = vmul.f32 %v2452, %v871
    %v2471 = vmul.f32 %v2455, %v871
    %v2472 = vsub.f32 %v2330, %v2456
    %v2473 = vsub.f32 %v2335, %v2457
    %v2474 = vsub.f32 %v2340, %v2458
    %v2475 = vsub.f32 %v2345, %v2459
    %v2476 = vsub.f32 %v2350, %v2460
    %v2477 = vsub.f32 %v2355, %v2461
    %v2478 = vsub.f32 %v2360, %v2462
    %v2479 = vsub.f32 %v2365, %v2463
    %v2480 = vsub.f32 %v2370, %v2464
    %v2481 = vsub.f32 %v2375, %v2465
    %v2482 = vsub.f32 %v2380, %v2466
    %v2483 = vsub.f32 %v2385, %v2467
    %v2484 = vsub.f32 %v2390, %v2468
    %v2485 = vsub.f32 %v2395, %v2469
    %v2486 = vsub.f32 %v2400, %v2470
    %v2487 = vsub.f32 %v2405, %v2471
    %v2488 = vmul.f32 %v2472, %v2472
    %v2489 = vmul.f32 %v2473, %v2473
    %v2490 = vmul.f32 %v2474, %v2474
    %v2491 = vmul.f32 %v2475, %v2475
    %v2492 = vmul.f32 %v2476, %v2476
    %v2493 = vmul.f32 %v2477, %v2477
    %v2494 = vmul.f32 %v2478, %v2478
    %v2495 = vmul.f32 %v2479, %v2479
    %v2496 = vmul.f32 %v2480, %v2480
    %v2497 = vmul.f32 %v2481, %v2481
    %v2498 = vmul.f32 %v2482, %v2482
    %v2499 = vmul.f32 %v2483, %v2483
    %v2500 = vmul.f32 %v2484, %v2484
    %v2501 = vmul.f32 %v2485, %v2485
    %v2502 = vmul.f32 %v2486, %v2486
    %v2503 = vmul.f32 %v2487, %v2487
    %v2504 = vsel %vm678, %v2488, 0.0
    %2505 = vadd.xlane.f32.xlu0 %v2504
    %v2506 = vpop.xlane.xlu0 %2505
    %v2507 = vsel %vm678, %v2489, 0.0
    %2508 = vadd.xlane.f32.xlu0 %v2507
    %v2509 = vpop.xlane.xlu0 %2508
    %v2510 = vsel %vm678, %v2490, 0.0
    %2511 = vadd.xlane.f32.xlu0 %v2510
    %v2512 = vpop.xlane.xlu0 %2511
    %v2513 = vsel %vm678, %v2491, 0.0
    %2514 = vadd.xlane.f32.xlu0 %v2513
    %v2515 = vpop.xlane.xlu0 %2514
    %v2516 = vsel %vm678, %v2492, 0.0
    %2517 = vadd.xlane.f32.xlu0 %v2516
    %v2518 = vpop.xlane.xlu0 %2517
    %v2519 = vsel %vm678, %v2493, 0.0
    %2520 = vadd.xlane.f32.xlu0 %v2519
    %v2521 = vpop.xlane.xlu0 %2520
    %v2522 = vsel %vm678, %v2494, 0.0
    %2523 = vadd.xlane.f32.xlu0 %v2522
    %v2524 = vpop.xlane.xlu0 %2523
    %v2525 = vsel %vm678, %v2495, 0.0
    %2526 = vadd.xlane.f32.xlu0 %v2525
    %v2527 = vpop.xlane.xlu0 %2526
    %v2528 = vsel %vm678, %v2496, 0.0
    %2529 = vadd.xlane.f32.xlu0 %v2528
    %v2530 = vpop.xlane.xlu0 %2529
    %v2531 = vsel %vm678, %v2497, 0.0
    %2532 = vadd.xlane.f32.xlu0 %v2531
    %v2533 = vpop.xlane.xlu0 %2532
    %v2534 = vsel %vm678, %v2498, 0.0
    %2535 = vadd.xlane.f32.xlu0 %v2534
    %v2536 = vpop.xlane.xlu0 %2535
    %v2537 = vsel %vm678, %v2499, 0.0
    %2538 = vadd.xlane.f32.xlu0 %v2537
    %v2539 = vpop.xlane.xlu0 %2538
    %v2540 = vsel %vm678, %v2500, 0.0
    %2541 = vadd.xlane.f32.xlu0 %v2540
    %v2542 = vpop.xlane.xlu0 %2541
    %v2543 = vsel %vm678, %v2501, 0.0
    %2544 = vadd.xlane.f32.xlu0 %v2543
    %v2545 = vpop.xlane.xlu0 %2544
    %v2546 = vsel %vm678, %v2502, 0.0
    %2547 = vadd.xlane.f32.xlu0 %v2546
    %v2548 = vpop.xlane.xlu0 %2547
    %v2549 = vsel %vm678, %v2503, 0.0
    %2550 = vadd.xlane.f32.xlu0 %v2549
    %v2551 = vpop.xlane.xlu0 %2550
    %v2552 = vmul.f32 %v2506, %v871
    %v2553 = vmul.f32 %v2509, %v871
    %v2554 = vmul.f32 %v2512, %v871
    %v2555 = vmul.f32 %v2515, %v871
    %v2556 = vmul.f32 %v2518, %v871
    %v2557 = vmul.f32 %v2521, %v871
    %v2558 = vmul.f32 %v2524, %v871
    %v2559 = vmul.f32 %v2527, %v871
    %v2560 = vmul.f32 %v2530, %v871
    %v2561 = vmul.f32 %v2533, %v871
    %v2562 = vmul.f32 %v2536, %v871
    %v2563 = vmul.f32 %v2539, %v871
    %v2564 = vmul.f32 %v2542, %v871
    %v2565 = vmul.f32 %v2545, %v871
    %v2566 = vmul.f32 %v2548, %v871
    %v2567 = vmul.f32 %v2551, %v871
    %v2568 = vadd.f32 %v2552, 1e-05
    %v2569 = vadd.f32 %v2553, 1e-05
    %v2570 = vadd.f32 %v2554, 1e-05
    %v2571 = vadd.f32 %v2555, 1e-05
    %v2572 = vadd.f32 %v2556, 1e-05
    %v2573 = vadd.f32 %v2557, 1e-05
    %v2574 = vadd.f32 %v2558, 1e-05
    %v2575 = vadd.f32 %v2559, 1e-05
    %v2576 = vadd.f32 %v2560, 1e-05
    %v2577 = vadd.f32 %v2561, 1e-05
    %v2578 = vadd.f32 %v2562, 1e-05
    %v2579 = vadd.f32 %v2563, 1e-05
    %v2580 = vadd.f32 %v2564, 1e-05
    %v2581 = vadd.f32 %v2565, 1e-05
    %v2582 = vadd.f32 %v2566, 1e-05
    %v2583 = vadd.f32 %v2567, 1e-05
    %v2584 = vrsqrt.pop %v2568
    %v2585 = vrsqrt.pop %v2569
    %v2586 = vrsqrt.pop %v2570
    %v2587 = vrsqrt.pop %v2571
    %v2588 = vrsqrt.pop %v2572
    %v2589 = vrsqrt.pop %v2573
    %v2590 = vrsqrt.pop %v2574
    %v2591 = vrsqrt.pop %v2575
    %v2592 = vrsqrt.pop %v2576
    %v2593 = vrsqrt.pop %v2577
    %v2594 = vrsqrt.pop %v2578
    %v2595 = vrsqrt.pop %v2579
    %v2596 = vrsqrt.pop %v2580
    %v2597 = vrsqrt.pop %v2581
    %v2598 = vrsqrt.pop %v2582
    %v2599 = vrsqrt.pop %v2583
    %v2600 = vmul.f32 %v2472, %v2584
    %v2601 = vmul.f32 %v2473, %v2585
    %v2602 = vmul.f32 %v2474, %v2586
    %v2603 = vmul.f32 %v2475, %v2587
    %v2604 = vmul.f32 %v2476, %v2588
    %v2605 = vmul.f32 %v2477, %v2589
    %v2606 = vmul.f32 %v2478, %v2590
    %v2607 = vmul.f32 %v2479, %v2591
    %v2608 = vmul.f32 %v2480, %v2592
    %v2609 = vmul.f32 %v2481, %v2593
    %v2610 = vmul.f32 %v2482, %v2594
    %v2611 = vmul.f32 %v2483, %v2595
    %v2612 = vmul.f32 %v2484, %v2596
    %v2613 = vmul.f32 %v2485, %v2597
    %v2614 = vmul.f32 %v2486, %v2598
    %v2615 = vmul.f32 %v2487, %v2599
    %v2616 = vlaneseq
    %v2617 = vshrl.u32 %v2616, 7
    %v2618 = vsub.s32 4, %v2617
    %v2619 = vrot.slane %v21, %v2618
    %v2620 = vmul.f32 %v2600, %v2619
    %v2621 = vmul.f32 %v2601, %v2619
    %v2622 = vmul.f32 %v2602, %v2619
    %v2623 = vmul.f32 %v2603, %v2619
    %v2624 = vmul.f32 %v2604, %v2619
    %v2625 = vmul.f32 %v2605, %v2619
    %v2626 = vmul.f32 %v2606, %v2619
    %v2627 = vmul.f32 %v2607, %v2619
    %v2628 = vmul.f32 %v2608, %v2619
    %v2629 = vmul.f32 %v2609, %v2619
    %v2630 = vmul.f32 %v2610, %v2619
    %v2631 = vmul.f32 %v2611, %v2619
    %v2632 = vmul.f32 %v2612, %v2619
    %v2633 = vmul.f32 %v2613, %v2619
    %v2634 = vmul.f32 %v2614, %v2619
    %v2635 = vmul.f32 %v2615, %v2619
    %v2636 = vlaneseq
    %v2637 = vshrl.u32 %v2636, 7
    %v2638 = vsub.s32 5, %v2637
    %v2639 = vrot.slane %v21, %v2638
    %v2640 = vadd.f32 %v2620, %v2639
    %v2641 = vadd.f32 %v2621, %v2639
    %v2642 = vadd.f32 %v2622, %v2639
    %v2643 = vadd.f32 %v2623, %v2639
    %v2644 = vadd.f32 %v2624, %v2639
    %v2645 = vadd.f32 %v2625, %v2639
    %v2646 = vadd.f32 %v2626, %v2639
    %v2647 = vadd.f32 %v2627, %v2639
    %v2648 = vadd.f32 %v2628, %v2639
    %v2649 = vadd.f32 %v2629, %v2639
    %v2650 = vadd.f32 %v2630, %v2639
    %v2651 = vadd.f32 %v2631, %v2639
    %v2652 = vadd.f32 %v2632, %v2639
    %v2653 = vadd.f32 %v2633, %v2639
    %v2654 = vadd.f32 %v2634, %v2639
    %v2655 = vadd.f32 %v2635, %v2639
    %v2656 = vmul.f32 %v2640, 0.5
    %v2657 = vmul.f32 %v2641, 0.5
    %v2658 = vmul.f32 %v2642, 0.5
    %v2659 = vmul.f32 %v2643, 0.5
    %v2660 = vmul.f32 %v2644, 0.5
    %v2661 = vmul.f32 %v2645, 0.5
    %v2662 = vmul.f32 %v2646, 0.5
    %v2663 = vmul.f32 %v2647, 0.5
    %v2664 = vmul.f32 %v2648, 0.5
    %v2665 = vmul.f32 %v2649, 0.5
    %v2666 = vmul.f32 %v2650, 0.5
    %v2667 = vmul.f32 %v2651, 0.5
    %v2668 = vmul.f32 %v2652, 0.5
    %v2669 = vmul.f32 %v2653, 0.5
    %v2670 = vmul.f32 %v2654, 0.5
    %v2671 = vmul.f32 %v2655, 0.5
    %v2672 = vmul.f32 %v2640, 0.70710677
    %v2673 = vmul.f32 %v2641, 0.70710677
    %v2674 = vmul.f32 %v2642, 0.70710677
    %v2675 = vmul.f32 %v2643, 0.70710677
    %v2676 = vmul.f32 %v2644, 0.70710677
    %v2677 = vmul.f32 %v2645, 0.70710677
    %v2678 = vmul.f32 %v2646, 0.70710677
    %v2679 = vmul.f32 %v2647, 0.70710677
    %v2680 = vmul.f32 %v2648, 0.70710677
    %v2681 = vmul.f32 %v2649, 0.70710677
    %v2682 = vmul.f32 %v2650, 0.70710677
    %v2683 = vmul.f32 %v2651, 0.70710677
    %v2684 = vmul.f32 %v2652, 0.70710677
    %v2685 = vmul.f32 %v2653, 0.70710677
    %v2686 = vmul.f32 %v2654, 0.70710677
    %v2687 = vmul.f32 %v2655, 0.70710677
    %v2688 = verf.f32.pop %v2672
    %v2689 = verf.f32.pop %v2673
    %v2690 = verf.f32.pop %v2674
    %v2691 = verf.f32.pop %v2675
    %v2692 = verf.f32.pop %v2676
    %v2693 = verf.f32.pop %v2677
    %v2694 = verf.f32.pop %v2678
    %v2695 = verf.f32.pop %v2679
    %v2696 = verf.f32.pop %v2680
    %v2697 = verf.f32.pop %v2681
    %v2698 = verf.f32.pop %v2682
    %v2699 = verf.f32.pop %v2683
    %v2700 = verf.f32.pop %v2684
    %v2701 = verf.f32.pop %v2685
    %v2702 = verf.f32.pop %v2686
    %v2703 = verf.f32.pop %v2687
    %v2704 = vadd.f32 %v2688, 1.0
    %v2705 = vadd.f32 %v2689, 1.0
    %v2706 = vadd.f32 %v2690, 1.0
    %v2707 = vadd.f32 %v2691, 1.0
    %v2708 = vadd.f32 %v2692, 1.0
    %v2709 = vadd.f32 %v2693, 1.0
    %v2710 = vadd.f32 %v2694, 1.0
    %v2711 = vadd.f32 %v2695, 1.0
    %v2712 = vadd.f32 %v2696, 1.0
    %v2713 = vadd.f32 %v2697, 1.0
    %v2714 = vadd.f32 %v2698, 1.0
    %v2715 = vadd.f32 %v2699, 1.0
    %v2716 = vadd.f32 %v2700, 1.0
    %v2717 = vadd.f32 %v2701, 1.0
    %v2718 = vadd.f32 %v2702, 1.0
    %v2719 = vadd.f32 %v2703, 1.0
    %v2720 = vmul.f32 %v2656, %v2704
    %v2721 = vmul.f32 %v2657, %v2705
    %v2722 = vmul.f32 %v2658, %v2706
    %v2723 = vmul.f32 %v2659, %v2707
    %v2724 = vmul.f32 %v2660, %v2708
    %v2725 = vmul.f32 %v2661, %v2709
    %v2726 = vmul.f32 %v2662, %v2710
    %v2727 = vmul.f32 %v2663, %v2711
    %v2728 = vmul.f32 %v2664, %v2712
    %v2729 = vmul.f32 %v2665, %v2713
    %v2730 = vmul.f32 %v2666, %v2714
    %v2731 = vmul.f32 %v2667, %v2715
    %v2732 = vmul.f32 %v2668, %v2716
    %v2733 = vmul.f32 %v2669, %v2717
    %v2734 = vmul.f32 %v2670, %v2718
    %v2735 = vmul.f32 %v2671, %v2719
    %2740 = vrot.lane.b32.xlu0 %v2724, 8
    %v2741 = vpop.permute.xlu0 %2740
    %2742 = vrot.lane.b32.xlu0 %v2725, 8
    %v2743 = vpop.permute.xlu0 %2742
    %2744 = vrot.lane.b32.xlu0 %v2726, 8
    %v2745 = vpop.permute.xlu0 %2744
    %2746 = vrot.lane.b32.xlu0 %v2727, 8
    %v2747 = vpop.permute.xlu0 %2746
    %2756 = vrot.lane.b32.xlu0 %v2728, 16
    %v2757 = vpop.permute.xlu0 %2756
    %2758 = vrot.lane.b32.xlu0 %v2729, 16
    %v2759 = vpop.permute.xlu0 %2758
    %2760 = vrot.lane.b32.xlu0 %v2730, 16
    %v2761 = vpop.permute.xlu0 %2760
    %2762 = vrot.lane.b32.xlu0 %v2731, 16
    %v2763 = vpop.permute.xlu0 %2762
    %2772 = vrot.lane.b32.xlu0 %v2732, 24
    %v2773 = vpop.permute.xlu0 %2772
    %2774 = vrot.lane.b32.xlu0 %v2733, 24
    %v2775 = vpop.permute.xlu0 %2774
    %2776 = vrot.lane.b32.xlu0 %v2734, 24
    %v2777 = vpop.permute.xlu0 %2776
    %2778 = vrot.lane.b32.xlu0 %v2735, 24
    %v2779 = vpop.permute.xlu0 %2778
    %v2784 = vsel %vm678, %v2720, %v2741
    %v2785 = vsel %vm678, %v2721, %v2743
    %v2786 = vsel %vm678, %v2722, %v2745
    %v2787 = vsel %vm678, %v2723, %v2747
    %v2788 = vsel %vm2176, %v2784, %v2757
    %v2789 = vsel %vm2176, %v2785, %v2759
    %v2790 = vsel %vm2176, %v2786, %v2761
    %v2791 = vsel %vm2176, %v2787, %v2763
    %v2792 = vsel %vm2193, %v2788, %v2773
    %v2793 = vsel %vm2193, %v2789, %v2775
    %v2794 = vsel %vm2193, %v2790, %v2777
    %v2795 = vsel %vm2193, %v2791, %v2779
    %v2796 = vlaneseq
    %v2797 = vshrl.u32 %v2796, 7
    %v2798 = vsub.s32 6, %v2797
    %v2799 = vrot.slane %v21, %v2798
    %2804 = vrot.lane.b32.xlu0 %v22, 120
    %v2805 = vpop.permute.xlu0 %2804
    %2806 = vrot.lane.b32.xlu0 %v23, 120
    %v2807 = vpop.permute.xlu0 %2806
    %2808 = vrot.lane.b32.xlu0 %v24, 120
    %v2809 = vpop.permute.xlu0 %2808
    %2810 = vrot.lane.b32.xlu0 %v25, 120
    %v2811 = vpop.permute.xlu0 %2810
    %v2817 = vsel %vm2214, %v2792, 0
    %v2820 = vsel %vm2214, %v2793, 0
    %v2823 = vsel %vm2214, %v2794, 0
    %v2826 = vsel %vm2214, %v2795, 0
    %2828 = vmatprep.subr.mxu0 0.0
    %2829 = vmatpush1.msra.mxu0 %v2805
    %2830 = vmatprep.subr.mxu0 0.0
    %2831 = vmatpush1.msra.mxu0 %v2807
    %2832 = vmatprep.subr.mxu0 0.0
    %2833 = vmatpush1.msra.mxu0 %v2809
    %2834 = vmatprep.subr.mxu0 0.0
    %2835 = vmatpush1.msra.mxu0 %v2811
    %2836 = vmatprep.subr.mxu0 0.0
    %2837 = vmatpush1.msra.mxu0 0.0
    %2838 = vmatprep.subr.mxu0 0.0
    %2839 = vmatpush1.msra.mxu0 0.0
    %2840 = vmatprep.subr.mxu0 0.0
    %2841 = vmatpush1.msra.mxu0 0.0
    %2842 = vmatprep.subr.mxu0 0.0
    %2843 = vmatpush1.msra.mxu0 0.0
    %2844 = vmatprep.subr.mxu0 0.0
    %2845 = vmatpush1.msra.mxu0 0.0
    %2846 = vmatprep.subr.mxu0 0.0
    %2847 = vmatpush1.msra.mxu0 0.0
    %2848 = vmatprep.subr.mxu0 0.0
    %2849 = vmatpush1.msra.mxu0 0.0
    %2850 = vmatprep.subr.mxu0 0.0
    %2851 = vmatpush1.msra.mxu0 0.0
    %2852 = vmatprep.subr.mxu0 0.0
    %2853 = vmatpush1.msra.mxu0 0.0
    %2854 = vmatprep.subr.mxu0 0.0
    %2855 = vmatpush1.msra.mxu0 0.0
    %2856 = vmatprep.subr.mxu0 0.0
    %2857 = vmatpush1.msra.mxu0 0.0
    %2858 = vmatprep.subr.mxu0 0.0
    %2859 = vmatpush1.msra.mxu0 0.0
    %2860 = vmatprep.subr.mxu0 0.0
    %2861 = vmatpush1.msra.mxu0 0.0
    %2862 = vmatprep.subr.mxu0 0.0
    %2863 = vmatpush1.msra.mxu0 0.0
    %2864 = vmatprep.subr.mxu0 0.0
    %2865 = vmatpush1.msra.mxu0 0.0
    %2866 = vmatprep.subr.mxu0 0.0
    %2867 = vmatpush1.msra.mxu0 0.0
    %2868 = vmatprep.subr.mxu0 0.0
    %2869 = vmatpush1.msra.mxu0 0.0
    %2870 = vmatprep.subr.mxu0 0.0
    %2871 = vmatpush1.msra.mxu0 0.0
    %2872 = vmatprep.subr.mxu0 0.0
    %2873 = vmatpush1.msra.mxu0 0.0
    %2874 = vmatprep.subr.mxu0 0.0
    %2875 = vmatpush1.msra.mxu0 0.0
    %2876 = vmatprep.subr.mxu0 0.0
    %2877 = vmatpush1.msra.mxu0 0.0
    %2878 = vmatprep.subr.mxu0 0.0
    %2879 = vmatpush1.msra.mxu0 0.0
    %2880 = vmatprep.subr.mxu0 0.0
    %2881 = vmatpush1.msra.mxu0 0.0
    %2882 = vmatprep.subr.mxu0 0.0
    %2883 = vmatpush1.msra.mxu0 0.0
    %2884 = vmatprep.subr.mxu0 0.0
    %2885 = vmatpush1.msra.mxu0 0.0
    %2886 = vmatprep.subr.mxu0 0.0
    %2887 = vmatpush1.msra.mxu0 0.0
    %2888 = vmatprep.subr.mxu0 0.0
    %2889 = vmatpush1.msra.mxu0 0.0
    %2890 = vmatprep.subr.mxu0 0.0
    %2891 = vmatpush1.msra.mxu0 0.0
    %2892 = vmatprep.mubr.f32.mxu0 0.0
    %2893 = vmatmul.mubr.f32.gmra.mrb[0].mxu0 %v2817
    %v2894 = vpop.f32.mrb[0].mxu0
    %v2895 = vadd.f32 %v2799, %v2894
    %v2896 = vpop.f32.mrb[0].mxu0
    %2897 = vmatprep.mubr.f32.mxu0 0.0
    %2898 = vmatmul.mubr.f32.gmra.mrb[0].mxu0 %v2820
    %v2899 = vpop.f32.mrb[0].mxu0
    %v2900 = vadd.f32 %v2799, %v2899
    %v2901 = vpop.f32.mrb[0].mxu0
    %2902 = vmatprep.mubr.f32.mxu0 0.0
    %2903 = vmatmul.mubr.f32.gmra.mrb[0].mxu0 %v2823
    %v2904 = vpop.f32.mrb[0].mxu0
    %v2905 = vadd.f32 %v2799, %v2904
    %v2906 = vpop.f32.mrb[0].mxu0
    %2907 = vmatprep.mubr.f32.mxu0 0.0
    %2908 = vmatmul.mubr.f32.gmra.mrb[0].mxu0 %v2826
    %v2909 = vpop.f32.mrb[0].mxu0
    %v2910 = vadd.f32 %v2799, %v2909
    %v2911 = vpop.f32.mrb[0].mxu0
    %2912 = vdwg.mxu0
    %v2913 = vld [vmem:[%s4] sm:$0xff]
    %v2914 = vld [vmem:[%s4 + $0x8] sm:$0xff]
    %v2915 = vadd.f32 %v2895, %v2913
    %v2916 = vadd.f32 %v2900, %v2914
    %2917 = vst.msk [vmem:[#allocation2] sm:$0xff] %vm2214, %v2915
    %2918 = vst.msk [vmem:[#allocation2 + $0x8] sm:$0xff] %vm2214, %v2916
    %v2919 = vadd.f32 %v2905, %v2913
    %v2920 = vadd.f32 %v2910, %v2914
    %s2921 = scalar_lea.vmem [#allocation2], 16
    %2922 = vst.msk [vmem:[%s2921] sm:$0xff] %vm2214, %v2919
    %2923 = vst.msk [vmem:[%s2921 + $0x8] sm:$0xff] %vm2214, %v2920
    // Predicated region
    $region22: #{image_adaptor_forward.1} parent=1 // pred_check
      _
    $region23: #{image_adaptor_forward.1} parent=1 // pred_check_branch
      %2925 = sbr.rel (0) target = $region25
    $region24: #{image_adaptor_forward.1} parent=1 // pred_region
      %s2927 = ssub.s32 512, 512
      %2928 = vsyncadd [#allocation3], %s2927
      %s2929 = sshll.u32 [#allocation2], 4
      %s2930 = int_to_ptr.vmem [resolvable:$true] %s2929
      %2935 = dma.vmem_to_hbm [thread:$0]  %s2930, 512, %s5, [#allocation3], 128, 128, 8
    $region25: #{image_adaptor_forward.1} parent=1 // pred_fallthru
      _
    // Predicated region
    $region26: #{image_adaptor_forward.1} parent=1 // pred_check
      _
    $region27: #{image_adaptor_forward.1} parent=1 // pred_check_branch
      %2937 = sbr.rel (0) target = $region29
    $region28: #{image_adaptor_forward.1} parent=1 // pred_region
      %2938 = dma.done [#allocation3], 512
    $region29: #{image_adaptor_forward.1} parent=1 // pred_fallthru
      _
    %2939 = vsyncpa [#allocation3], 1

</llo_original>
